<compile_context>
chip_gen: v7x
topology: tpu7x:2x2x1
jax: 0.10.0
libtpu: 0.0.40
codegen_flags: <defaults>
</compile_context>

<pallas_src>
import math
from functools import partial

import jax
import jax.numpy as jnp
from jax import lax
from jax.experimental import pallas as pl
from jax.experimental.pallas import tpu as pltpu

BN_EPS = 1e-5
VMEM_LIMIT = 32 * 1024 * 1024   # explicit: v5e default scoped limit is only 16 MiB


# ----------------------------------------------------------------------------
# BatchNorm (training-mode batch stats) folded analytically into the Linear.
# h = x W + b ; mean(h) = mean(x) W + b ; var(h)_j = W_:,j^T Cov(x) W_:,j (biased, as BN uses).
# Tiny O(N * Cin^2) reduction, kept in plain JAX.
# ----------------------------------------------------------------------------
def fold_batchnorm(x, W, b, gamma, beta):
    N = x.shape[0]
    mean_x = jnp.mean(x, axis=0, keepdims=True)                 # (1, Cin)
    xc = x - mean_x
    cov = (xc.T @ xc) / N                                       # (Cin, Cin)
    mean_h = mean_x @ W + b                                     # (1, Cout)
    var_h = jnp.sum(W * (cov @ W), axis=0, keepdims=True)       # (1, Cout)
    scale = gamma * lax.rsqrt(var_h + BN_EPS)                   # (1, Cout)
    return W * scale, (b - mean_h) * scale + beta


# ----------------------------------------------------------------------------
# Fused kernel: per-batch Linear(+folded BN)+ReLU  ->  kNN(pos, sub_pos, k)  ->  scatter-max.
# grid = (B, S // tm); each program handles one batch's tm query centers against that batch's
# Nb candidates (no cross-batch mask).  yT is computed once per batch at m == 0.
# ----------------------------------------------------------------------------
def _td_fused_kernel(sm_ref, pmT_ref, xT_ref, wt_ref, bt_ref, out_ref, y_scr, *, k):
    # --- MLP once per batch (m == 0): yT = relu(Wt @ xT + bt), feature-major (Cout, Nb) ---
    @pl.when(pl.program_id(1) == 0)
    def _():
        h = jnp.dot(wt_ref[...], xT_ref[0], preferred_element_type=jnp.float32)
        y_scr[...] = jnp.maximum(h + bt_ref[...], 0.0)

    sm = sm_ref[0]                               # (tm, 5)  = [q, |q|^2, 1]
    pmT = pmT_ref[0]                             # (5, Nb)  = [-2p ; 1 ; |p|^2]  (lane-dense)
    yT = y_scr[...]                              # (Cout, Nb)                    (lane-dense)
    tm = sm.shape[0]
    nb = pmT.shape[1]
    cout = yT.shape[0]

    # Full squared distance (>= 0 up to rounding) in one canonical (M,K)@(K,N) matmul.
    d = jnp.dot(sm, pmT, preferred_element_type=jnp.float32)    # (tm, Nb)
    d = jnp.maximum(d, 0.0)                      # clamp tiny negatives -> monotone bitcast

    # Packed sort key: high bits = distance bits, low log2(Nb) bits = lane index.
    # One min-reduce per step yields a unique (lowest-index tie-broken) nearest neighbour.
    nbits = max(1, (nb - 1).bit_length())
    hi_mask = ~((1 << nbits) - 1)                # python int, e.g. -32 for nbits=5
    lane_iota = lax.broadcasted_iota(jnp.int32, (tm, nb), 1)
    key0 = pltpu.bitcast(
        (pltpu.bitcast(d, jnp.int32) & hi_mask) | lane_iota, jnp.float32)

    steps = min(k, nb)                           # never runs out of candidates -> no guard
    acc0 = jnp.full((cout, tm), -jnp.inf, dtype=jnp.float32)

    def body(_, carry):
        key, acc = carry
        kmin = jnp.min(key, axis=1, keepdims=True)               # (tm, 1)  single XLU reduce
        onehot = key == kmin                                     # exactly one lane per row
        # Feature gather, trans-B matmul: (Cout, Nb) x (tm, Nb)^T -> (Cout, tm)
        selT = lax.dot_general(yT, onehot.astype(jnp.float32),
                               (((1,), (1,)), ((), ())),
                               preferred_element_type=jnp.float32)
        acc = jnp.maximum(acc, selT)
        key = jnp.where(onehot, jnp.inf, key)                    # retire picked neighbour
        return key, acc

    # Full unroll for small tiles (LLO scheduling visibility); partial unroll when the
    # (tm, Nb) temporaries would otherwise spill vregs.
    unroll = steps if (tm * nb <= 128 * 1024) else 4
    _, acc = lax.fori_loop(0, steps, body, (key0, acc0), unroll=unroll)

    out_ref[0] = acc                             # (Cout, tm): lane-dense store


def fused_mlp_knn_max(sm, pmT, xT, Wt, bt, *, B, Nb, S, Cout, k):
    Cin = xT.shape[1]
    # 256-wide MXU tiles on v6e/v7x when S allows; 128 otherwise; full S for small clouds.
    tm = 256 if S % 256 == 0 else (128 if S % 128 == 0 else S)
    grid = (B, S // tm)

    outT = pl.pallas_call(
        partial(_td_fused_kernel, k=k),
        out_shape=jax.ShapeDtypeStruct((B, Cout, S), jnp.float32),
        grid=grid,
        in_specs=[
            pl.BlockSpec((1, tm, 5), lambda b, m: (b, m, 0)),      # queries (aug)
            pl.BlockSpec((1, 5, Nb), lambda b, m: (b, 0, 0)),      # candidates (aug, transposed)
            pl.BlockSpec((1, Cin, Nb), lambda b, m: (b, 0, 0)),    # features (transposed)
            pl.BlockSpec((Cout, Cin), lambda b, m: (0, 0)),        # folded W^T
            pl.BlockSpec((Cout, 1), lambda b, m: (0, 0)),          # folded bias
        ],
        out_specs=pl.BlockSpec((1, Cout, tm), lambda b, m: (b, 0, m)),
        scratch_shapes=[pltpu.VMEM((Cout, Nb), jnp.float32)],      # yT, resident per batch
        compiler_params=pltpu.CompilerParams(
            # m must iterate sequentially within a batch (yT scratch carry) -> "arbitrary";
            # b is megacore-shardable.
            dimension_semantics=("parallel", "arbitrary"),
            vmem_limit_bytes=VMEM_LIMIT),
    )(sm, pmT, xT, Wt, bt)

    return outT.transpose(0, 2, 1).reshape(B * S, Cout)


# ----------------------------------------------------------------------------
# Farthest point sampling (per batch, deterministic start at local index 0).
# TODO(synk): FPS is an inherently sequential, data-dependent selection loop and is the
# end-to-end critical path for large Nb; a Pallas version would keep pos resident in VMEM
# (grid=(B,), running-min in scratch).  torch_geometric's fps defaults to random_start=True;
# here the start is deterministic (index 0), so sampled clusters can differ from the reference.
# ----------------------------------------------------------------------------
def fps_per_batch(pos_b, num_samples):
    Nb = pos_b.shape[0]
    sel0 = jnp.zeros((num_samples,), jnp.int32)
    mind0 = jnp.full((Nb,), jnp.inf, jnp.float32)

    def body(i, carry):
        sel, mind = carry
        last = pos_b[sel[i - 1]]
        dsq = jnp.sum((pos_b - last) ** 2, axis=1)
        mind = jnp.minimum(mind, dsq)
        nxt = jnp.argmax(mind).astype(jnp.int32)
        sel = sel.at[i].set(nxt)
        return sel, mind

    sel, _ = lax.fori_loop(1, num_samples, body, (sel0, mind0))
    return sel


# ----------------------------------------------------------------------------
# TransitionDown forward: (out, sub_pos, sub_batch)
# ----------------------------------------------------------------------------
def transition_down(x, pos, batch, params, *, B, Nb, ratio, k):
    W, b, gamma, beta = params
    Cin = x.shape[1]
    Cout = W.shape[1]
    S = math.ceil(ratio * Nb)

    # 1. FPS per batch -> global cluster indices (grouped per batch, PyG order)
    pos_b = pos.reshape(B, Nb, 3)
    local_idx = jax.vmap(lambda p: fps_per_batch(p, S))(pos_b)          # (B, S)
    id_clusters = (jnp.arange(B, dtype=jnp.int32)[:, None] * Nb + local_idx).reshape(-1)
    sub_pos = pos[id_clusters]
    sub_batch = batch[id_clusters]

    # 2. Fold BN(train-mode batch stats) into the Linear weights (tiny reduction, plain JAX).
    W_fold, b_fold = fold_batchnorm(x, W, b, gamma, beta)

    # 3. Wrapper-side layout prep (one cheap XLA pass each), then the fused Pallas kernel.
    p2 = jnp.sum(pos_b * pos_b, axis=-1, keepdims=True)                 # (B, Nb, 1)
    pmT = jnp.concatenate([-2.0 * pos_b, jnp.ones_like(p2), p2],
                          axis=-1).transpose(0, 2, 1)                   # (B, 5, Nb)
    sub_b = sub_pos.reshape(B, S, 3)
    q2 = jnp.sum(sub_b * sub_b, axis=-1, keepdims=True)                 # (B, S, 1)
    sm = jnp.concatenate([sub_b, q2, jnp.ones_like(q2)], axis=-1)       # (B, S, 5)
    xT = x.reshape(B, Nb, Cin).transpose(0, 2, 1)                       # (B, Cin, Nb)
    Wt = W_fold.T                                                       # (Cout, Cin)
    bt = b_fold.reshape(Cout, 1)                                        # (Cout, 1)

    out = fused_mlp_knn_max(sm, pmT, xT, Wt, bt, B=B, Nb=Nb, S=S, Cout=Cout, k=k)
    return out, sub_pos, sub_batch


if __name__ == "__main__":
    B, Nb = 2, 32          # 2 point clouds of 32 points each
    Cin, Cout = 4, 32
    ratio, k = 0.25, 16
    N = B * Nb

    key = jax.random.PRNGKey(0)
    k1, k2, k3, k4 = jax.random.split(key, 4)
    pos = jax.random.normal(k1, (N, 3), jnp.float32)
    x = jax.random.normal(k2, (N, Cin), jnp.float32)
    batch = jnp.repeat(jnp.arange(B, dtype=jnp.int32), Nb)

    # Deterministic parameters: Linear(Cin, Cout) (PyTorch-style uniform init),
    # BatchNorm1d(Cout) with gamma=1, beta=0 (PyTorch defaults, training mode).
    bound = 1.0 / math.sqrt(Cin)
    W = jax.random.uniform(k3, (Cin, Cout), jnp.float32, -bound, bound)
    b = jax.random.uniform(k4, (1, Cout), jnp.float32, -bound, bound)
    gamma = jnp.ones((1, Cout), jnp.float32)
    beta = jnp.zeros((1, Cout), jnp.float32)

    out, sub_pos, sub_batch = transition_down(
        x, pos, batch, (W, b, gamma, beta), B=B, Nb=Nb, ratio=ratio, k=k)

    jax.block_until_ready((out, sub_pos, sub_batch))
    S = math.ceil(ratio * Nb)
    assert out.shape == (B * S, Cout)
    assert sub_pos.shape == (B * S, 3)
    assert sub_batch.shape == (B * S,)
    assert bool(jnp.all(jnp.isfinite(out)))
    print("KERNEL_OK")
</pallas_src>

<mosaic_0001>
module attributes {stable_mosaic.version = 11 : i64} {
  func.func @_td_fused_kernel(%arg0: i32, %arg1: i32, %arg2: memref<1x8x5xf32, #tpu.memory_space<vmem>>, %arg3: memref<1x5x32xf32, #tpu.memory_space<vmem>>, %arg4: memref<1x4x32xf32, #tpu.memory_space<vmem>>, %arg5: memref<32x4xf32, #tpu.memory_space<vmem>>, %arg6: memref<32x1xf32, #tpu.memory_space<vmem>>, %arg7: memref<1x32x8xf32, #tpu.memory_space<vmem>>, %arg8: memref<32x32xf32, #tpu.memory_space<vmem>>) attributes {dimension_semantics = [#tpu.dimension_semantics<parallel>, #tpu.dimension_semantics<arbitrary>], iteration_bounds = array<i64: 2, 1>, scalar_prefetch = 0 : i64, scratch_operands = 1 : i64, tpu.core_type = #tpu.core_type<tc>, window_params = [{transform_indices = @transform_0, window_bounds = array<i64: 1, 8, 5>}, {transform_indices = @transform_1, window_bounds = array<i64: 1, 5, 32>}, {transform_indices = @transform_2, window_bounds = array<i64: 1, 4, 32>}, {pipeline_mode = #tpu.pipeline_mode<synchronous>, transform_indices = @transform_3, window_bounds = array<i64: 32, 4>}, {pipeline_mode = #tpu.pipeline_mode<synchronous>, transform_indices = @transform_4, window_bounds = array<i64: 32, 1>}, {transform_indices = @transform_5, window_bounds = array<i64: 1, 32, 8>}]} {
    %c0_i32 = arith.constant 0 : i32
    %0 = arith.cmpi eq, %arg1, %c0_i32 : i32
    %1 = arith.extui %0 : i1 to i32
    %c0_i32_0 = arith.constant 0 : i32
    %2 = arith.cmpi ne, %1, %c0_i32_0 : i32
    scf.if %2 {
      %c0_62 = arith.constant 0 : index
      %c0_63 = arith.constant 0 : index
      %181 = vector.load %arg5[%c0_62, %c0_63] : memref<32x4xf32, #tpu.memory_space<vmem>>, vector<32x4xf32>
      %c0_64 = arith.constant 0 : index
      %c0_65 = arith.constant 0 : index
      %c0_66 = arith.constant 0 : index
      %182 = vector.load %arg4[%c0_64, %c0_65, %c0_66] : memref<1x4x32xf32, #tpu.memory_space<vmem>>, vector<1x4x32xf32>
      %183 = vector.shape_cast %182 : vector<1x4x32xf32> to vector<4x32xf32>
      %cst_67 = arith.constant dense<0.000000e+00> : vector<32x32xf32>
      %184 = tpu.matmul %181, %183, %cst_67 {dimension_numbers = #tpu.dot_dimension_numbers<[1], [0], [0], [1], [0, 0, 1, 1], [], []>} : vector<32x4xf32>, vector<4x32xf32>, vector<32x32xf32> -> vector<32x32xf32>
      %c0_68 = arith.constant 0 : index
      %c0_69 = arith.constant 0 : index
      %185 = vector.load %arg6[%c0_68, %c0_69] : memref<32x1xf32, #tpu.memory_space<vmem>>, vector<32x1xf32>
      %186 = vector.broadcast %185 : vector<32x1xf32> to vector<32x32xf32>
      %187 = arith.addf %184, %186 : vector<32x32xf32>
      %cst_70 = arith.constant 0.000000e+00 : f32
      %188 = vector.broadcast %cst_70 : f32 to vector<32x32xf32>
      %189 = arith.maximumf %187, %188 : vector<32x32xf32>
      %c0_71 = arith.constant 0 : index
      %c0_72 = arith.constant 0 : index
      %190 = vector.load %arg8[%c0_71, %c0_72] : memref<32x32xf32, #tpu.memory_space<vmem>>, vector<32x32xf32>
      tpu.vector_store %arg8[%c0_71, %c0_72], %189 {strides = array<i32>} : memref<32x32xf32, #tpu.memory_space<vmem>>, vector<32x32xf32>,
    } else {
    }
    %c0 = arith.constant 0 : index
    %c0_1 = arith.constant 0 : index
    %c0_2 = arith.constant 0 : index
    %3 = vector.load %arg2[%c0, %c0_1, %c0_2] : memref<1x8x5xf32, #tpu.memory_space<vmem>>, vector<1x8x5xf32>
    %4 = vector.shape_cast %3 : vector<1x8x5xf32> to vector<8x5xf32>
    %c0_3 = arith.constant 0 : index
    %c0_4 = arith.constant 0 : index
    %c0_5 = arith.constant 0 : index
    %5 = vector.load %arg3[%c0_3, %c0_4, %c0_5] : memref<1x5x32xf32, #tpu.memory_space<vmem>>, vector<1x5x32xf32>
    %6 = vector.shape_cast %5 : vector<1x5x32xf32> to vector<5x32xf32>
    %c0_6 = arith.constant 0 : index
    %c0_7 = arith.constant 0 : index
    %7 = vector.load %arg8[%c0_6, %c0_7] : memref<32x32xf32, #tpu.memory_space<vmem>>, vector<32x32xf32>
    %cst = arith.constant dense<0.000000e+00> : vector<8x32xf32>
    %8 = tpu.matmul %4, %6, %cst {dimension_numbers = #tpu.dot_dimension_numbers<[1], [0], [0], [1], [0, 0, 1, 1], [], []>} : vector<8x5xf32>, vector<5x32xf32>, vector<8x32xf32> -> vector<8x32xf32>
    %cst_8 = arith.constant 0.000000e+00 : f32
    %9 = vector.broadcast %cst_8 : f32 to vector<8x32xf32>
    %10 = arith.maximumf %8, %9 : vector<8x32xf32>
    %11 = tpu.iota {dimensions = array<i32: 1>} : vector<8x32xi32>
    %12 = tpu.bitcast %10 : vector<8x32xf32> -> vector<8x32xi32>
    %c-32_i32 = arith.constant -32 : i32
    %13 = vector.broadcast %c-32_i32 : i32 to vector<8x32xi32>
    %14 = arith.andi %12, %13 : vector<8x32xi32>
    %15 = arith.ori %14, %11 : vector<8x32xi32>
    %16 = tpu.bitcast %15 : vector<8x32xi32> -> vector<8x32xf32>
    %cst_9 = arith.constant 0xFF800000 : f32
    %17 = vector.broadcast %cst_9 : f32 to vector<32x8xf32>
    %c0_i32_10 = arith.constant 0 : i32
    %cst_11 = arith.constant dense<0x7F800000> : vector<8xf32>
    %18 = vector.multi_reduction <minimumf>, %16, %cst_11 [1] : vector<8x32xf32> to vector<8xf32>
    %19 = vector.shape_cast %18 : vector<8xf32> to vector<8x1xf32>
    %20 = vector.broadcast %19 : vector<8x1xf32> to vector<8x32xf32>
    %21 = arith.cmpf oeq, %16, %20 : vector<8x32xf32>
    %22 = arith.extui %21 : vector<8x32xi1> to vector<8x32xi32>
    %23 = arith.sitofp %22 : vector<8x32xi32> to vector<8x32xf32>
    %cst_12 = arith.constant dense<0.000000e+00> : vector<32x8xf32>
    %24 = tpu.matmul %7, %23, %cst_12 {dimension_numbers = #tpu.dot_dimension_numbers<[1], [1], [0], [0], [0, 0, 1, 0], [], []>} : vector<32x32xf32>, vector<8x32xf32>, vector<32x8xf32> -> vector<32x8xf32>
    %25 = arith.maximumf %17, %24 : vector<32x8xf32>
    %cst_13 = arith.constant 0x7F800000 : f32
    %26 = vector.broadcast %cst_13 : f32 to vector<8x32xf32>
    %27 = arith.select %21, %26, %16 : vector<8x32xi1>, vector<8x32xf32>
    %c1_i32 = arith.constant 1 : i32
    %cst_14 = arith.constant dense<0x7F800000> : vector<8xf32>
    %28 = vector.multi_reduction <minimumf>, %27, %cst_14 [1] : vector<8x32xf32> to vector<8xf32>
    %29 = vector.shape_cast %28 : vector<8xf32> to vector<8x1xf32>
    %30 = vector.broadcast %29 : vector<8x1xf32> to vector<8x32xf32>
    %31 = arith.cmpf oeq, %27, %30 : vector<8x32xf32>
    %32 = arith.extui %31 : vector<8x32xi1> to vector<8x32xi32>
    %33 = arith.sitofp %32 : vector<8x32xi32> to vector<8x32xf32>
    %cst_15 = arith.constant dense<0.000000e+00> : vector<32x8xf32>
    %34 = tpu.matmul %7, %33, %cst_15 {dimension_numbers = #tpu.dot_dimension_numbers<[1], [1], [0], [0], [0, 0, 1, 0], [], []>} : vector<32x32xf32>, vector<8x32xf32>, vector<32x8xf32> -> vector<32x8xf32>
    %35 = arith.maximumf %25, %34 : vector<32x8xf32>
    %cst_16 = arith.constant 0x7F800000 : f32
    %36 = vector.broadcast %cst_16 : f32 to vector<8x32xf32>
    %37 = arith.select %31, %36, %27 : vector<8x32xi1>, vector<8x32xf32>
    %c2_i32 = arith.constant 2 : i32
    %cst_17 = arith.constant dense<0x7F800000> : vector<8xf32>
    %38 = vector.multi_reduction <minimumf>, %37, %cst_17 [1] : vector<8x32xf32> to vector<8xf32>
    %39 = vector.shape_cast %38 : vector<8xf32> to vector<8x1xf32>
    %40 = vector.broadcast %39 : vector<8x1xf32> to vector<8x32xf32>
    %41 = arith.cmpf oeq, %37, %40 : vector<8x32xf32>
    %42 = arith.extui %41 : vector<8x32xi1> to vector<8x32xi32>
    %43 = arith.sitofp %42 : vector<8x32xi32> to vector<8x32xf32>
    %cst_18 = arith.constant dense<0.000000e+00> : vector<32x8xf32>
    %44 = tpu.matmul %7, %43, %cst_18 {dimension_numbers = #tpu.dot_dimension_numbers<[1], [1], [0], [0], [0, 0, 1, 0], [], []>} : vector<32x32xf32>, vector<8x32xf32>, vector<32x8xf32> -> vector<32x8xf32>
    %45 = arith.maximumf %35, %44 : vector<32x8xf32>
    %cst_19 = arith.constant 0x7F800000 : f32
    %46 = vector.broadcast %cst_19 : f32 to vector<8x32xf32>
    %47 = arith.select %41, %46, %37 : vector<8x32xi1>, vector<8x32xf32>
    %c3_i32 = arith.constant 3 : i32
    %cst_20 = arith.constant dense<0x7F800000> : vector<8xf32>
    %48 = vector.multi_reduction <minimumf>, %47, %cst_20 [1] : vector<8x32xf32> to vector<8xf32>
    %49 = vector.shape_cast %48 : vector<8xf32> to vector<8x1xf32>
    %50 = vector.broadcast %49 : vector<8x1xf32> to vector<8x32xf32>
    %51 = arith.cmpf oeq, %47, %50 : vector<8x32xf32>
    %52 = arith.extui %51 : vector<8x32xi1> to vector<8x32xi32>
    %53 = arith.sitofp %52 : vector<8x32xi32> to vector<8x32xf32>
    %cst_21 = arith.constant dense<0.000000e+00> : vector<32x8xf32>
    %54 = tpu.matmul %7, %53, %cst_21 {dimension_numbers = #tpu.dot_dimension_numbers<[1], [1], [0], [0], [0, 0, 1, 0], [], []>} : vector<32x32xf32>, vector<8x32xf32>, vector<32x8xf32> -> vector<32x8xf32>
    %55 = arith.maximumf %45, %54 : vector<32x8xf32>
    %cst_22 = arith.constant 0x7F800000 : f32
    %56 = vector.broadcast %cst_22 : f32 to vector<8x32xf32>
    %57 = arith.select %51, %56, %47 : vector<8x32xi1>, vector<8x32xf32>
    %c4_i32 = arith.constant 4 : i32
    %cst_23 = arith.constant dense<0x7F800000> : vector<8xf32>
    %58 = vector.multi_reduction <minimumf>, %57, %cst_23 [1] : vector<8x32xf32> to vector<8xf32>
    %59 = vector.shape_cast %58 : vector<8xf32> to vector<8x1xf32>
    %60 = vector.broadcast %59 : vector<8x1xf32> to vector<8x32xf32>
    %61 = arith.cmpf oeq, %57, %60 : vector<8x32xf32>
    %62 = arith.extui %61 : vector<8x32xi1> to vector<8x32xi32>
    %63 = arith.sitofp %62 : vector<8x32xi32> to vector<8x32xf32>
    %cst_24 = arith.constant dense<0.000000e+00> : vector<32x8xf32>
    %64 = tpu.matmul %7, %63, %cst_24 {dimension_numbers = #tpu.dot_dimension_numbers<[1], [1], [0], [0], [0, 0, 1, 0], [], []>} : vector<32x32xf32>, vector<8x32xf32>, vector<32x8xf32> -> vector<32x8xf32>
    %65 = arith.maximumf %55, %64 : vector<32x8xf32>
    %cst_25 = arith.constant 0x7F800000 : f32
    %66 = vector.broadcast %cst_25 : f32 to vector<8x32xf32>
    %67 = arith.select %61, %66, %57 : vector<8x32xi1>, vector<8x32xf32>
    %c5_i32 = arith.constant 5 : i32
    %cst_26 = arith.constant dense<0x7F800000> : vector<8xf32>
    %68 = vector.multi_reduction <minimumf>, %67, %cst_26 [1] : vector<8x32xf32> to vector<8xf32>
    %69 = vector.shape_cast %68 : vector<8xf32> to vector<8x1xf32>
    %70 = vector.broadcast %69 : vector<8x1xf32> to vector<8x32xf32>
    %71 = arith.cmpf oeq, %67, %70 : vector<8x32xf32>
    %72 = arith.extui %71 : vector<8x32xi1> to vector<8x32xi32>
    %73 = arith.sitofp %72 : vector<8x32xi32> to vector<8x32xf32>
    %cst_27 = arith.constant dense<0.000000e+00> : vector<32x8xf32>
    %74 = tpu.matmul %7, %73, %cst_27 {dimension_numbers = #tpu.dot_dimension_numbers<[1], [1], [0], [0], [0, 0, 1, 0], [], []>} : vector<32x32xf32>, vector<8x32xf32>, vector<32x8xf32> -> vector<32x8xf32>
    %75 = arith.maximumf %65, %74 : vector<32x8xf32>
    %cst_28 = arith.constant 0x7F800000 : f32
    %76 = vector.broadcast %cst_28 : f32 to vector<8x32xf32>
    %77 = arith.select %71, %76, %67 : vector<8x32xi1>, vector<8x32xf32>
    %c6_i32 = arith.constant 6 : i32
    %cst_29 = arith.constant dense<0x7F800000> : vector<8xf32>
    %78 = vector.multi_reduction <minimumf>, %77, %cst_29 [1] : vector<8x32xf32> to vector<8xf32>
    %79 = vector.shape_cast %78 : vector<8xf32> to vector<8x1xf32>
    %80 = vector.broadcast %79 : vector<8x1xf32> to vector<8x32xf32>
    %81 = arith.cmpf oeq, %77, %80 : vector<8x32xf32>
    %82 = arith.extui %81 : vector<8x32xi1> to vector<8x32xi32>
    %83 = arith.sitofp %82 : vector<8x32xi32> to vector<8x32xf32>
    %cst_30 = arith.constant dense<0.000000e+00> : vector<32x8xf32>
    %84 = tpu.matmul %7, %83, %cst_30 {dimension_numbers = #tpu.dot_dimension_numbers<[1], [1], [0], [0], [0, 0, 1, 0], [], []>} : vector<32x32xf32>, vector<8x32xf32>, vector<32x8xf32> -> vector<32x8xf32>
    %85 = arith.maximumf %75, %84 : vector<32x8xf32>
    %cst_31 = arith.constant 0x7F800000 : f32
    %86 = vector.broadcast %cst_31 : f32 to vector<8x32xf32>
    %87 = arith.select %81, %86, %77 : vector<8x32xi1>, vector<8x32xf32>
    %c7_i32 = arith.constant 7 : i32
    %cst_32 = arith.constant dense<0x7F800000> : vector<8xf32>
    %88 = vector.multi_reduction <minimumf>, %87, %cst_32 [1] : vector<8x32xf32> to vector<8xf32>
    %89 = vector.shape_cast %88 : vector<8xf32> to vector<8x1xf32>
    %90 = vector.broadcast %89 : vector<8x1xf32> to vector<8x32xf32>
    %91 = arith.cmpf oeq, %87, %90 : vector<8x32xf32>
    %92 = arith.extui %91 : vector<8x32xi1> to vector<8x32xi32>
    %93 = arith.sitofp %92 : vector<8x32xi32> to vector<8x32xf32>
    %cst_33 = arith.constant dense<0.000000e+00> : vector<32x8xf32>
    %94 = tpu.matmul %7, %93, %cst_33 {dimension_numbers = #tpu.dot_dimension_numbers<[1], [1], [0], [0], [0, 0, 1, 0], [], []>} : vector<32x32xf32>, vector<8x32xf32>, vector<32x8xf32> -> vector<32x8xf32>
    %95 = arith.maximumf %85, %94 : vector<32x8xf32>
    %cst_34 = arith.constant 0x7F800000 : f32
    %96 = vector.broadcast %cst_34 : f32 to vector<8x32xf32>
    %97 = arith.select %91, %96, %87 : vector<8x32xi1>, vector<8x32xf32>
    %c8_i32 = arith.constant 8 : i32
    %cst_35 = arith.constant dense<0x7F800000> : vector<8xf32>
    %98 = vector.multi_reduction <minimumf>, %97, %cst_35 [1] : vector<8x32xf32> to vector<8xf32>
    %99 = vector.shape_cast %98 : vector<8xf32> to vector<8x1xf32>
    %100 = vector.broadcast %99 : vector<8x1xf32> to vector<8x32xf32>
    %101 = arith.cmpf oeq, %97, %100 : vector<8x32xf32>
    %102 = arith.extui %101 : vector<8x32xi1> to vector<8x32xi32>
    %103 = arith.sitofp %102 : vector<8x32xi32> to vector<8x32xf32>
    %cst_36 = arith.constant dense<0.000000e+00> : vector<32x8xf32>
    %104 = tpu.matmul %7, %103, %cst_36 {dimension_numbers = #tpu.dot_dimension_numbers<[1], [1], [0], [0], [0, 0, 1, 0], [], []>} : vector<32x32xf32>, vector<8x32xf32>, vector<32x8xf32> -> vector<32x8xf32>
    %105 = arith.maximumf %95, %104 : vector<32x8xf32>
    %cst_37 = arith.constant 0x7F800000 : f32
    %106 = vector.broadcast %cst_37 : f32 to vector<8x32xf32>
    %107 = arith.select %101, %106, %97 : vector<8x32xi1>, vector<8x32xf32>
    %c9_i32 = arith.constant 9 : i32
    %cst_38 = arith.constant dense<0x7F800000> : vector<8xf32>
    %108 = vector.multi_reduction <minimumf>, %107, %cst_38 [1] : vector<8x32xf32> to vector<8xf32>
    %109 = vector.shape_cast %108 : vector<8xf32> to vector<8x1xf32>
    %110 = vector.broadcast %109 : vector<8x1xf32> to vector<8x32xf32>
    %111 = arith.cmpf oeq, %107, %110 : vector<8x32xf32>
    %112 = arith.extui %111 : vector<8x32xi1> to vector<8x32xi32>
    %113 = arith.sitofp %112 : vector<8x32xi32> to vector<8x32xf32>
    %cst_39 = arith.constant dense<0.000000e+00> : vector<32x8xf32>
    %114 = tpu.matmul %7, %113, %cst_39 {dimension_numbers = #tpu.dot_dimension_numbers<[1], [1], [0], [0], [0, 0, 1, 0], [], []>} : vector<32x32xf32>, vector<8x32xf32>, vector<32x8xf32> -> vector<32x8xf32>
    %115 = arith.maximumf %105, %114 : vector<32x8xf32>
    %cst_40 = arith.constant 0x7F800000 : f32
    %116 = vector.broadcast %cst_40 : f32 to vector<8x32xf32>
    %117 = arith.select %111, %116, %107 : vector<8x32xi1>, vector<8x32xf32>
    %c10_i32 = arith.constant 10 : i32
    %cst_41 = arith.constant dense<0x7F800000> : vector<8xf32>
    %118 = vector.multi_reduction <minimumf>, %117, %cst_41 [1] : vector<8x32xf32> to vector<8xf32>
    %119 = vector.shape_cast %118 : vector<8xf32> to vector<8x1xf32>
    %120 = vector.broadcast %119 : vector<8x1xf32> to vector<8x32xf32>
    %121 = arith.cmpf oeq, %117, %120 : vector<8x32xf32>
    %122 = arith.extui %121 : vector<8x32xi1> to vector<8x32xi32>
    %123 = arith.sitofp %122 : vector<8x32xi32> to vector<8x32xf32>
    %cst_42 = arith.constant dense<0.000000e+00> : vector<32x8xf32>
    %124 = tpu.matmul %7, %123, %cst_42 {dimension_numbers = #tpu.dot_dimension_numbers<[1], [1], [0], [0], [0, 0, 1, 0], [], []>} : vector<32x32xf32>, vector<8x32xf32>, vector<32x8xf32> -> vector<32x8xf32>
    %125 = arith.maximumf %115, %124 : vector<32x8xf32>
    %cst_43 = arith.constant 0x7F800000 : f32
    %126 = vector.broadcast %cst_43 : f32 to vector<8x32xf32>
    %127 = arith.select %121, %126, %117 : vector<8x32xi1>, vector<8x32xf32>
    %c11_i32 = arith.constant 11 : i32
    %cst_44 = arith.constant dense<0x7F800000> : vector<8xf32>
    %128 = vector.multi_reduction <minimumf>, %127, %cst_44 [1] : vector<8x32xf32> to vector<8xf32>
    %129 = vector.shape_cast %128 : vector<8xf32> to vector<8x1xf32>
    %130 = vector.broadcast %129 : vector<8x1xf32> to vector<8x32xf32>
    %131 = arith.cmpf oeq, %127, %130 : vector<8x32xf32>
    %132 = arith.extui %131 : vector<8x32xi1> to vector<8x32xi32>
    %133 = arith.sitofp %132 : vector<8x32xi32> to vector<8x32xf32>
    %cst_45 = arith.constant dense<0.000000e+00> : vector<32x8xf32>
    %134 = tpu.matmul %7, %133, %cst_45 {dimension_numbers = #tpu.dot_dimension_numbers<[1], [1], [0], [0], [0, 0, 1, 0], [], []>} : vector<32x32xf32>, vector<8x32xf32>, vector<32x8xf32> -> vector<32x8xf32>
    %135 = arith.maximumf %125, %134 : vector<32x8xf32>
    %cst_46 = arith.constant 0x7F800000 : f32
    %136 = vector.broadcast %cst_46 : f32 to vector<8x32xf32>
    %137 = arith.select %131, %136, %127 : vector<8x32xi1>, vector<8x32xf32>
    %c12_i32 = arith.constant 12 : i32
    %cst_47 = arith.constant dense<0x7F800000> : vector<8xf32>
    %138 = vector.multi_reduction <minimumf>, %137, %cst_47 [1] : vector<8x32xf32> to vector<8xf32>
    %139 = vector.shape_cast %138 : vector<8xf32> to vector<8x1xf32>
    %140 = vector.broadcast %139 : vector<8x1xf32> to vector<8x32xf32>
    %141 = arith.cmpf oeq, %137, %140 : vector<8x32xf32>
    %142 = arith.extui %141 : vector<8x32xi1> to vector<8x32xi32>
    %143 = arith.sitofp %142 : vector<8x32xi32> to vector<8x32xf32>
    %cst_48 = arith.constant dense<0.000000e+00> : vector<32x8xf32>
    %144 = tpu.matmul %7, %143, %cst_48 {dimension_numbers = #tpu.dot_dimension_numbers<[1], [1], [0], [0], [0, 0, 1, 0], [], []>} : vector<32x32xf32>, vector<8x32xf32>, vector<32x8xf32> -> vector<32x8xf32>
    %145 = arith.maximumf %135, %144 : vector<32x8xf32>
    %cst_49 = arith.constant 0x7F800000 : f32
    %146 = vector.broadcast %cst_49 : f32 to vector<8x32xf32>
    %147 = arith.select %141, %146, %137 : vector<8x32xi1>, vector<8x32xf32>
    %c13_i32 = arith.constant 13 : i32
    %cst_50 = arith.constant dense<0x7F800000> : vector<8xf32>
    %148 = vector.multi_reduction <minimumf>, %147, %cst_50 [1] : vector<8x32xf32> to vector<8xf32>
    %149 = vector.shape_cast %148 : vector<8xf32> to vector<8x1xf32>
    %150 = vector.broadcast %149 : vector<8x1xf32> to vector<8x32xf32>
    %151 = arith.cmpf oeq, %147, %150 : vector<8x32xf32>
    %152 = arith.extui %151 : vector<8x32xi1> to vector<8x32xi32>
    %153 = arith.sitofp %152 : vector<8x32xi32> to vector<8x32xf32>
    %cst_51 = arith.constant dense<0.000000e+00> : vector<32x8xf32>
    %154 = tpu.matmul %7, %153, %cst_51 {dimension_numbers = #tpu.dot_dimension_numbers<[1], [1], [0], [0], [0, 0, 1, 0], [], []>} : vector<32x32xf32>, vector<8x32xf32>, vector<32x8xf32> -> vector<32x8xf32>
    %155 = arith.maximumf %145, %154 : vector<32x8xf32>
    %cst_52 = arith.constant 0x7F800000 : f32
    %156 = vector.broadcast %cst_52 : f32 to vector<8x32xf32>
    %157 = arith.select %151, %156, %147 : vector<8x32xi1>, vector<8x32xf32>
    %c14_i32 = arith.constant 14 : i32
    %cst_53 = arith.constant dense<0x7F800000> : vector<8xf32>
    %158 = vector.multi_reduction <minimumf>, %157, %cst_53 [1] : vector<8x32xf32> to vector<8xf32>
    %159 = vector.shape_cast %158 : vector<8xf32> to vector<8x1xf32>
    %160 = vector.broadcast %159 : vector<8x1xf32> to vector<8x32xf32>
    %161 = arith.cmpf oeq, %157, %160 : vector<8x32xf32>
    %162 = arith.extui %161 : vector<8x32xi1> to vector<8x32xi32>
    %163 = arith.sitofp %162 : vector<8x32xi32> to vector<8x32xf32>
    %cst_54 = arith.constant dense<0.000000e+00> : vector<32x8xf32>
    %164 = tpu.matmul %7, %163, %cst_54 {dimension_numbers = #tpu.dot_dimension_numbers<[1], [1], [0], [0], [0, 0, 1, 0], [], []>} : vector<32x32xf32>, vector<8x32xf32>, vector<32x8xf32> -> vector<32x8xf32>
    %165 = arith.maximumf %155, %164 : vector<32x8xf32>
    %cst_55 = arith.constant 0x7F800000 : f32
    %166 = vector.broadcast %cst_55 : f32 to vector<8x32xf32>
    %167 = arith.select %161, %166, %157 : vector<8x32xi1>, vector<8x32xf32>
    %c15_i32 = arith.constant 15 : i32
    %cst_56 = arith.constant dense<0x7F800000> : vector<8xf32>
    %168 = vector.multi_reduction <minimumf>, %167, %cst_56 [1] : vector<8x32xf32> to vector<8xf32>
    %169 = vector.shape_cast %168 : vector<8xf32> to vector<8x1xf32>
    %170 = vector.broadcast %169 : vector<8x1xf32> to vector<8x32xf32>
    %171 = arith.cmpf oeq, %167, %170 : vector<8x32xf32>
    %172 = arith.extui %171 : vector<8x32xi1> to vector<8x32xi32>
    %173 = arith.sitofp %172 : vector<8x32xi32> to vector<8x32xf32>
    %cst_57 = arith.constant dense<0.000000e+00> : vector<32x8xf32>
    %174 = tpu.matmul %7, %173, %cst_57 {dimension_numbers = #tpu.dot_dimension_numbers<[1], [1], [0], [0], [0, 0, 1, 0], [], []>} : vector<32x32xf32>, vector<8x32xf32>, vector<32x8xf32> -> vector<32x8xf32>
    %175 = arith.maximumf %165, %174 : vector<32x8xf32>
    %cst_58 = arith.constant 0x7F800000 : f32
    %176 = vector.broadcast %cst_58 : f32 to vector<8x32xf32>
    %177 = arith.select %171, %176, %167 : vector<8x32xi1>, vector<8x32xf32>
    %c0_59 = arith.constant 0 : index
    %c0_60 = arith.constant 0 : index
    %c0_61 = arith.constant 0 : index
    %178 = vector.load %arg7[%c0_59, %c0_60, %c0_61] : memref<1x32x8xf32, #tpu.memory_space<vmem>>, vector<1x32x8xf32>
    %179 = vector.shape_cast %178 : vector<1x32x8xf32> to vector<32x8xf32>
    %180 = vector.shape_cast %175 : vector<32x8xf32> to vector<1x32x8xf32>
    tpu.vector_store %arg7[%c0_59, %c0_60, %c0_61], %180 {strides = array<i32>} : memref<1x32x8xf32, #tpu.memory_space<vmem>>, vector<1x32x8xf32>,
    return
  }
  func.func @transform_0(%arg0: i32, %arg1: i32) -> (i32, i32, i32) {
    %c0_i32 = arith.constant 0 : i32
    %c0_i32_0 = arith.constant 0 : i32
    return %arg0, %arg1, %c0_i32 : i32, i32, i32
  }
  func.func @transform_1(%arg0: i32, %arg1: i32) -> (i32, i32, i32) {
    %c0_i32 = arith.constant 0 : i32
    %c0_i32_0 = arith.constant 0 : i32
    %c0_i32_1 = arith.constant 0 : i32
    return %arg0, %c0_i32, %c0_i32_0 : i32, i32, i32
  }
  func.func @transform_2(%arg0: i32, %arg1: i32) -> (i32, i32, i32) {
    %c0_i32 = arith.constant 0 : i32
    %c0_i32_0 = arith.constant 0 : i32
    %c0_i32_1 = arith.constant 0 : i32
    return %arg0, %c0_i32, %c0_i32_0 : i32, i32, i32
  }
  func.func @transform_3(%arg0: i32, %arg1: i32) -> (i32, i32) {
    %c0_i32 = arith.constant 0 : i32
    %c0_i32_0 = arith.constant 0 : i32
    %c0_i32_1 = arith.constant 0 : i32
    return %c0_i32, %c0_i32_0 : i32, i32
  }
  func.func @transform_4(%arg0: i32, %arg1: i32) -> (i32, i32) {
    %c0_i32 = arith.constant 0 : i32
    %c0_i32_0 = arith.constant 0 : i32
    %c0_i32_1 = arith.constant 0 : i32
    return %c0_i32, %c0_i32_0 : i32, i32
  }
  func.func @transform_5(%arg0: i32, %arg1: i32) -> (i32, i32, i32) {
    %c0_i32 = arith.constant 0 : i32
    %c0_i32_0 = arith.constant 0 : i32
    return %arg0, %c0_i32, %arg1 : i32, i32, i32
  }
}

</mosaic_0001>

<llo_original>
// kernel: tpu_custom_call.1
$region0: #{tpu_custom_call.1}
  #allocation0 [shape = 'u32[]', space=smem, size = 0x4, offset = 0x4, fixed_abs, tag = 'smem constant byte address 0x4 - core index']
  #allocation1 [shape = 'u32[144,128]{1,0:T(1,128)}', space=vmem, size = 0x12000, scoped, tag = 'internal scratch']
  #allocation2 [shape = 'f32[32,32]{1,0:T(8,128)}', space=vmem, size = 0x4000, scoped, tag = 'scratch operand']
  %s0 = inlined_call_operand.vmem [shape: f32[2,8,5], index: 0, kind: input, shape index: {}]
  %s1 = inlined_call_operand.vmem [shape: f32[2,5,32], index: 1, kind: input, shape index: {}]
  %s2 = inlined_call_operand.vmem [shape: f32[2,4,32], index: 2, kind: input, shape index: {}]
  %s3 = inlined_call_operand.vmem [shape: f32[32,4], index: 3, kind: input, shape index: {}]
  %s4 = inlined_call_operand.vmem [shape: f32[32,1], index: 4, kind: input, shape index: {}]
  %s5 = inlined_call_operand.vmem [shape: f32[2,32,8], index: 5, kind: output, shape index: {}]
  %s6 = sld [smem:[#allocation0]]
  $region57: #{tpu_custom_call.1} parent=0
    _
  %s8 = ssub.s32 1, %s6
  %s9 = scalar_select 0, %s8, %s6
  loop: start=0, step=1, limit=4
  $region2: #{tpu_custom_call.1} parent=0 // loop_pre_header
    _
  $region3: #{tpu_custom_call.1} parent=0 // loop_header
    %s11 = sphi 0, %s15
    %p12 = scmp.ge.s32.totalorder %s11, 4
    %s18 = sphi 0, %s30
    %s19 = sphi 0, %s26
    %s20 = sphi 0, %s18
    %s21 = sphi 0, %s19
    %s22 = sphi 0, %s20
    %s23 = sphi 0, %s21
    %s35 = sphi 0, %s37
    %s38 = sphi 0, %s35
    %s39 = sphi 0, %s38
    %s55 = sphi 0, %s39
    %s61 = sphi 0, %s63
    %s64 = sphi 0, %s61
    %s65 = sphi 0, %s64
    %s81 = sphi 0, %s65
    %s87 = sphi 0, %s89
    %s90 = sphi 0, %s87
    %s91 = sphi 0, %s90
    %s107 = sphi 0, %s91
    %s111 = sphi 0, %s111
    %s113 = sphi 0, %s111
    %s114 = sphi 0, %s113
    %s128 = sphi 0, %s114
    %s132 = sphi 0, %s132
    %s134 = sphi 0, %s132
    %s135 = sphi 0, %s134
    %s149 = sphi 0, %s135
    %s157 = sphi 0, %s159
    %s160 = sphi 0, %s157
    %s161 = sphi 0, %s160
    %s177 = sphi 0, %s161
  $region4: #{tpu_custom_call.1} parent=0 // loop_header_branch
    %14 = sbr.rel (%p12) target = $region8
  $region5: #{tpu_custom_call.1} parent=0 // loop_body
    %s16 = ssub.s32 %s11, 1
    %s17 = ssub.s32 %s11, 2
    %s24 = sadd.s32 1, %s19
    %p25 = scmp.ge.s32.totalorder %s24, 1
    %s26 = scalar_select %p25, 0, %s24
    %s27 = sadd.s32 1, %s18
    %s28 = scalar_select %p25, %s27, %s18
    %p29 = scmp.ge.s32.totalorder %s28, 2
    %s30 = scalar_select %p29, 0, %s28
    %s31 = ssub.s32 %s18, %s30
    %s32 = ssub.s32 %s19, %s26
    %s33 = sor.u32 %s31, %s32
    %p34 = scmp.eq.s32.totalorder %s33, 0
    %s36 = sadd.s32 %s35, 1
    %s37 = scalar_select %p34, %s35, %s36
    %p40 = pneg %p34
    %p41 = scmp.eq.s32.totalorder %s11, 1
    %p42 = por %p40, %p41
    %p43 = scmp.ne.s32.totalorder %s35, %s38
    %p44 = scmp.eq.s32.totalorder %s11, 0
    %p45 = por %p43, %p44
    %p46 = scmp.ne.s32.totalorder %s35, %s38
    %p47 = scmp.eq.s32.totalorder %s16, 1
    %p48 = por %p46, %p47
    %p49 = scmp.ne.s32.totalorder %s38, %s39
    %p50 = scmp.eq.s32.totalorder %s16, 0
    %p51 = por %p49, %p50
    %p52 = scmp.ne.s32.totalorder %s38, %s39
    %p53 = scmp.eq.s32.totalorder %s17, 1
    %p54 = por %p52, %p53
    %p56 = scmp.ne.s32.totalorder %s39, %s55
    %p57 = scmp.eq.s32.totalorder %s17, 0
    %p58 = por %p56, %p57
    %s59 = ssub.s32 %s18, %s30
    %p60 = scmp.eq.s32.totalorder %s59, 0
    %s62 = sadd.s32 %s61, 1
    %s63 = scalar_select %p60, %s61, %s62
    %p66 = pneg %p60
    %p67 = scmp.eq.s32.totalorder %s11, 1
    %p68 = por %p66, %p67
    %p69 = scmp.ne.s32.totalorder %s61, %s64
    %p70 = scmp.eq.s32.totalorder %s11, 0
    %p71 = por %p69, %p70
    %p72 = scmp.ne.s32.totalorder %s61, %s64
    %p73 = scmp.eq.s32.totalorder %s16, 1
    %p74 = por %p72, %p73
    %p75 = scmp.ne.s32.totalorder %s64, %s65
    %p76 = scmp.eq.s32.totalorder %s16, 0
    %p77 = por %p75, %p76
    %p78 = scmp.ne.s32.totalorder %s64, %s65
    %p79 = scmp.eq.s32.totalorder %s17, 1
    %p80 = por %p78, %p79
    %p82 = scmp.ne.s32.totalorder %s65, %s81
    %p83 = scmp.eq.s32.totalorder %s17, 0
    %p84 = por %p82, %p83
    %s85 = ssub.s32 %s18, %s30
    %p86 = scmp.eq.s32.totalorder %s85, 0
    %s88 = sadd.s32 %s87, 1
    %s89 = scalar_select %p86, %s87, %s88
    %p92 = pneg %p86
    %p93 = scmp.eq.s32.totalorder %s11, 1
    %p94 = por %p92, %p93
    %p95 = scmp.ne.s32.totalorder %s87, %s90
    %p96 = scmp.eq.s32.totalorder %s11, 0
    %p97 = por %p95, %p96
    %p98 = scmp.ne.s32.totalorder %s87, %s90
    %p99 = scmp.eq.s32.totalorder %s16, 1
    %p100 = por %p98, %p99
    %p101 = scmp.ne.s32.totalorder %s90, %s91
    %p102 = scmp.eq.s32.totalorder %s16, 0
    %p103 = por %p101, %p102
    %p104 = scmp.ne.s32.totalorder %s90, %s91
    %p105 = scmp.eq.s32.totalorder %s17, 1
    %p106 = por %p104, %p105
    %p108 = scmp.ne.s32.totalorder %s91, %s107
    %p109 = scmp.eq.s32.totalorder %s17, 0
    %p110 = por %p108, %p109
    %s112 = sadd.s32 %s111, 1
    %p115 = scmp.eq.s32.totalorder %s11, 1
    %p116 = scmp.ne.s32.totalorder %s111, %s113
    %p117 = scmp.eq.s32.totalorder %s11, 0
    %p118 = por %p116, %p117
    %p119 = scmp.ne.s32.totalorder %s111, %s113
    %p120 = scmp.eq.s32.totalorder %s16, 1
    %p121 = por %p119, %p120
    %p122 = scmp.ne.s32.totalorder %s113, %s114
    %p123 = scmp.eq.s32.totalorder %s16, 0
    %p124 = por %p122, %p123
    %p125 = scmp.ne.s32.totalorder %s113, %s114
    %p126 = scmp.eq.s32.totalorder %s17, 1
    %p127 = por %p125, %p126
    %p129 = scmp.ne.s32.totalorder %s114, %s128
    %p130 = scmp.eq.s32.totalorder %s17, 0
    %p131 = por %p129, %p130
    %s133 = sadd.s32 %s132, 1
    %p136 = scmp.eq.s32.totalorder %s11, 1
    %p137 = scmp.ne.s32.totalorder %s132, %s134
    %p138 = scmp.eq.s32.totalorder %s11, 0
    %p139 = por %p137, %p138
    %p140 = scmp.ne.s32.totalorder %s132, %s134
    %p141 = scmp.eq.s32.totalorder %s16, 1
    %p142 = por %p140, %p141
    %p143 = scmp.ne.s32.totalorder %s134, %s135
    %p144 = scmp.eq.s32.totalorder %s16, 0
    %p145 = por %p143, %p144
    %p146 = scmp.ne.s32.totalorder %s134, %s135
    %p147 = scmp.eq.s32.totalorder %s17, 1
    %p148 = por %p146, %p147
    %p150 = scmp.ne.s32.totalorder %s135, %s149
    %p151 = scmp.eq.s32.totalorder %s17, 0
    %p152 = por %p150, %p151
    %s153 = ssub.s32 %s18, %s30
    %s154 = ssub.s32 %s19, %s26
    %s155 = sor.u32 %s153, %s154
    %p156 = scmp.eq.s32.totalorder %s155, 0
    %s158 = sadd.s32 %s157, 1
    %s159 = scalar_select %p156, %s157, %s158
    %p162 = pneg %p156
    %p163 = scmp.eq.s32.totalorder %s11, 1
    %p164 = por %p162, %p163
    %p165 = scmp.ne.s32.totalorder %s157, %s160
    %p166 = scmp.eq.s32.totalorder %s11, 0
    %p167 = por %p165, %p166
    %p168 = scmp.ne.s32.totalorder %s157, %s160
    %p169 = scmp.eq.s32.totalorder %s16, 1
    %p170 = por %p168, %p169
    %p171 = scmp.ne.s32.totalorder %s160, %s161
    %p172 = scmp.eq.s32.totalorder %s16, 0
    %p173 = por %p171, %p172
    %p174 = scmp.ne.s32.totalorder %s160, %s161
    %p175 = scmp.eq.s32.totalorder %s17, 1
    %p176 = por %p174, %p175
    %p178 = scmp.ne.s32.totalorder %s161, %s177
    %p179 = scmp.eq.s32.totalorder %s17, 0
    %p180 = por %p178, %p179
    %p181 = scmp.le.s32.totalorder 1, %s11
    %p182 = scmp.lt.s32.totalorder %s11, 3
    %p183 = pnand %p181, %p182
    %p184 = pneg %p183
    // Predicated region
    $region9: #{tpu_custom_call.1} parent=5 // pred_check
      _
    $region10: #{tpu_custom_call.1} parent=5 // pred_check_branch
      %186 = sbr.rel (%p183) target = $region12
    $region11: #{tpu_custom_call.1} parent=5 // pred_region
      %s187 = ssub.s32 %s11, 1
      // Predicated region
      $region13: #{tpu_custom_call.1} parent=11 // pred_check
        %p188 = pneg %p124
      $region14: #{tpu_custom_call.1} parent=11 // pred_check_branch
        %190 = sbr.rel (%p188) target = $region16
      $region15: #{tpu_custom_call.1} parent=11 // pred_region
        _
      $region16: #{tpu_custom_call.1} parent=11 // pred_fallthru
        _
      // Predicated region
      $region17: #{tpu_custom_call.1} parent=11 // pred_check
        %p191 = pneg %p145
      $region18: #{tpu_custom_call.1} parent=11 // pred_check_branch
        %193 = sbr.rel (%p191) target = $region20
      $region19: #{tpu_custom_call.1} parent=11 // pred_region
        _
      $region20: #{tpu_custom_call.1} parent=11 // pred_fallthru
        _
    $region12: #{tpu_custom_call.1} parent=5 // pred_fallthru
      _
    %p194 = scmp.lt.s32.totalorder %s11, 2
    // Predicated region
    $region21: #{tpu_custom_call.1} parent=5 // pred_check
      %p195 = pneg %p194
    $region22: #{tpu_custom_call.1} parent=5 // pred_check_branch
      %197 = sbr.rel (%p195) target = $region24
    $region23: #{tpu_custom_call.1} parent=5 // pred_region
      // Predicated region
      $region25: #{tpu_custom_call.1} parent=23 // pred_check
        %p198 = pneg %p45
      $region26: #{tpu_custom_call.1} parent=23 // pred_check_branch
        %200 = sbr.rel (%p198) target = $region28
      $region27: #{tpu_custom_call.1} parent=23 // pred_region
        %p201 = scmp.lt.s32.totalorder %s18, 1
        %s202 = scalar_select %p201, %s18, 1
        %p203 = scmp.lt.s32.totalorder %s19, 0
        %s204 = scalar_select %p203, %s19, 0
        %s205 = sadd.s32 %s204, %s202
        %s206 = smul.addr %s205, 8
        %s207 = scalar_lea.vmem %s0, %s206
      $region28: #{tpu_custom_call.1} parent=23 // pred_fallthru
        _
      // Predicated region
      $region29: #{tpu_custom_call.1} parent=23 // pred_check
        %p208 = pneg %p71
      $region30: #{tpu_custom_call.1} parent=23 // pred_check_branch
        %210 = sbr.rel (%p208) target = $region32
      $region31: #{tpu_custom_call.1} parent=23 // pred_region
        %p211 = scmp.lt.s32.totalorder %s18, 1
        %s212 = scalar_select %p211, %s18, 1
        %s213 = smul.addr %s212, 8
        %s214 = scalar_lea.vmem %s1, %s213
      $region32: #{tpu_custom_call.1} parent=23 // pred_fallthru
        _
      // Predicated region
      $region33: #{tpu_custom_call.1} parent=23 // pred_check
        %p215 = pneg %p97
      $region34: #{tpu_custom_call.1} parent=23 // pred_check_branch
        %217 = sbr.rel (%p215) target = $region36
      $region35: #{tpu_custom_call.1} parent=23 // pred_region
        %p218 = scmp.lt.s32.totalorder %s18, 1
        %s219 = scalar_select %p218, %s18, 1
        %s220 = smul.addr %s219, 4
        %s221 = scalar_lea.vmem %s2, %s220
      $region36: #{tpu_custom_call.1} parent=23 // pred_fallthru
        _
    $region24: #{tpu_custom_call.1} parent=5 // pred_fallthru
      _
    %p222 = scmp.le.s32.totalorder 1, %s11
    %p223 = scmp.lt.s32.totalorder %s11, 3
    %p224 = pnand %p222, %p223
    %p225 = pneg %p224
    // Predicated region
    $region37: #{tpu_custom_call.1} parent=5 // pred_check
      _
    $region38: #{tpu_custom_call.1} parent=5 // pred_check_branch
      %227 = sbr.rel (%p224) target = $region40
    $region39: #{tpu_custom_call.1} parent=5 // pred_region
      %s228 = ssub.s32 %s11, 1
      %p229 = scmp.lt.s32.totalorder %s20, 1
      %s230 = scalar_select %p229, %s20, 1
      %p231 = scmp.lt.s32.totalorder %s21, 0
      %s232 = scalar_select %p231, %s21, 0
      %s233 = sadd.s32 %s232, %s230
      %s234 = smul.addr %s233, 8
      %s235 = scalar_lea.vmem %s0, %s234
      %p236 = pneg %p51
      %p237 = pneg %p48
      %p238 = scmp.lt.s32.totalorder %s20, 1
      %s239 = scalar_select %p238, %s20, 1
      %s240 = smul.addr %s239, 8
      %s241 = scalar_lea.vmem %s1, %s240
      %p242 = pneg %p77
      %p243 = pneg %p74
      %p244 = scmp.lt.s32.totalorder %s20, 1
      %s245 = scalar_select %p244, %s20, 1
      %s246 = smul.addr %s245, 4
      %s247 = scalar_lea.vmem %s2, %s246
      %p248 = pneg %p103
      %p249 = pneg %p100
      %p250 = pneg %p124
      %p251 = pneg %p121
      %p252 = pneg %p145
      %p253 = pneg %p142
      %p254 = pneg %p173
      %p255 = pneg %p170
      %p256 = scmp.lt.s32.totalorder %s20, 1
      %s257 = scalar_select %p256, %s20, 1
      %p258 = scmp.lt.s32.totalorder %s21, 0
      %s259 = scalar_select %p258, %s21, 0
      %s260 = smul.addr %s257, 4
      %s261 = sadd.s32 %s259, %s260
      %s262 = smul.addr %s261, 8
      %s263 = scalar_lea.vmem %s5, %s262
      %p264 = scmp.lt.s32.totalorder %s20, 1
      %s265 = scalar_select %p264, %s20, 1
      %p266 = scmp.lt.s32.totalorder %s21, 0
      %s267 = scalar_select %p266, %s21, 0
      %s268 = sadd.s32 %s267, %s265
      %s269 = smul.addr %s268, 8
      %s270 = scalar_lea.vmem %s0, %s269
      %p271 = scmp.lt.s32.totalorder %s20, 1
      %s272 = scalar_select %p271, %s20, 1
      %s273 = smul.addr %s272, 8
      %s274 = scalar_lea.vmem %s1, %s273
      %p275 = scmp.lt.s32.totalorder %s20, 1
      %s276 = scalar_select %p275, %s20, 1
      %s277 = smul.addr %s276, 4
      %s278 = scalar_lea.vmem %s2, %s277
      %p279 = scmp.lt.s32.totalorder %s20, 1
      %s280 = scalar_select %p279, %s20, 1
      %p281 = scmp.lt.s32.totalorder %s21, 0
      %s282 = scalar_select %p281, %s21, 0
      %s283 = smul.addr %s280, 4
      %s284 = sadd.s32 %s282, %s283
      %s285 = smul.addr %s284, 8
      %s286 = scalar_lea.vmem %s5, %s285
      %p287 = scmp.eq.s32.totalorder %s21, 0
      // Predicated region
      $region41: #{tpu_custom_call.1} parent=39 // pred_check
        %p288 = pneg %p287
      $region42: #{tpu_custom_call.1} parent=39 // pred_check_branch
        %290 = sbr.rel (%p288) target = $region44
      $region43: #{tpu_custom_call.1} parent=39 // pred_region
        %v291 = vld [vmem:[%s3] sm:$0xff]
        %v292 = vld [vmem:[%s3 + $0x8] sm:$0xff]
        %v293 = vld [vmem:[%s3 + $0x10] sm:$0xff]
        %v294 = vld [vmem:[%s3 + $0x18] sm:$0xff]
        %v295 = vld [vmem:[%s278] sm:$0xf]
        %v296 = vld [vmem:[%s4] sm:$0xff]
        %v297 = vld [vmem:[%s4 + $0x8] sm:$0xff]
        %v298 = vld [vmem:[%s4 + $0x10] sm:$0xff]
        %v299 = vld [vmem:[%s4 + $0x18] sm:$0xff]
        %301 = vset.pattern.permute.xlu0 0
        %302 = vperm.xlu0 %301, %v296
        %v303 = vpop.permute.xlu0 %302
        %306 = vset.pattern.permute.xlu0 0
        %307 = vperm.xlu0 %306, %v297
        %v308 = vpop.permute.xlu0 %307
        %311 = vset.pattern.permute.xlu0 0
        %312 = vperm.xlu0 %311, %v298
        %v313 = vpop.permute.xlu0 %312
        %316 = vset.pattern.permute.xlu0 0
        %317 = vperm.xlu0 %316, %v299
        %v318 = vpop.permute.xlu0 %317
        %vm320 = vcmask 31744
        %v322 = vsel %vm320, %v291, 0
        %v325 = vsel %vm320, %v292, 0
        %v328 = vsel %vm320, %v293, 0
        %v331 = vsel %vm320, %v294, 0
        %vm333 = vcmask 1043456
        %v335 = vsel %vm333, %v295, 0
        %337 = vmatprep.subr.mxu0 0.0
        %338 = vmatpush1.msra.mxu0 %v335
        %339 = vmatprep.subr.mxu0 0.0
        %340 = vmatpush1.msra.mxu0 0.0
        %341 = vmatprep.subr.mxu0 0.0
        %342 = vmatpush1.msra.mxu0 0.0
        %343 = vmatprep.subr.mxu0 0.0
        %344 = vmatpush1.msra.mxu0 0.0
        %345 = vmatprep.subr.mxu0 0.0
        %346 = vmatpush1.msra.mxu0 0.0
        %347 = vmatprep.subr.mxu0 0.0
        %348 = vmatpush1.msra.mxu0 0.0
        %349 = vmatprep.subr.mxu0 0.0
        %350 = vmatpush1.msra.mxu0 0.0
        %351 = vmatprep.subr.mxu0 0.0
        %352 = vmatpush1.msra.mxu0 0.0
        %353 = vmatprep.subr.mxu0 0.0
        %354 = vmatpush1.msra.mxu0 0.0
        %355 = vmatprep.subr.mxu0 0.0
        %356 = vmatpush1.msra.mxu0 0.0
        %357 = vmatprep.subr.mxu0 0.0
        %358 = vmatpush1.msra.mxu0 0.0
        %359 = vmatprep.subr.mxu0 0.0
        %360 = vmatpush1.msra.mxu0 0.0
        %361 = vmatprep.subr.mxu0 0.0
        %362 = vmatpush1.msra.mxu0 0.0
        %363 = vmatprep.subr.mxu0 0.0
        %364 = vmatpush1.msra.mxu0 0.0
        %365 = vmatprep.subr.mxu0 0.0
        %366 = vmatpush1.msra.mxu0 0.0
        %367 = vmatprep.subr.mxu0 0.0
        %368 = vmatpush1.msra.mxu0 0.0
        %369 = vmatprep.subr.mxu0 0.0
        %370 = vmatpush1.msra.mxu0 0.0
        %371 = vmatprep.subr.mxu0 0.0
        %372 = vmatpush1.msra.mxu0 0.0
        %373 = vmatprep.subr.mxu0 0.0
        %374 = vmatpush1.msra.mxu0 0.0
        %375 = vmatprep.subr.mxu0 0.0
        %376 = vmatpush1.msra.mxu0 0.0
        %377 = vmatprep.subr.mxu0 0.0
        %378 = vmatpush1.msra.mxu0 0.0
        %379 = vmatprep.subr.mxu0 0.0
        %380 = vmatpush1.msra.mxu0 0.0
        %381 = vmatprep.subr.mxu0 0.0
        %382 = vmatpush1.msra.mxu0 0.0
        %383 = vmatprep.subr.mxu0 0.0
        %384 = vmatpush1.msra.mxu0 0.0
        %385 = vmatprep.subr.mxu0 0.0
        %386 = vmatpush1.msra.mxu0 0.0
        %387 = vmatprep.subr.mxu0 0.0
        %388 = vmatpush1.msra.mxu0 0.0
        %389 = vmatprep.subr.mxu0 0.0
        %390 = vmatpush1.msra.mxu0 0.0
        %391 = vmatprep.subr.mxu0 0.0
        %392 = vmatpush1.msra.mxu0 0.0
        %393 = vmatprep.subr.mxu0 0.0
        %394 = vmatpush1.msra.mxu0 0.0
        %395 = vmatprep.subr.mxu0 0.0
        %396 = vmatpush1.msra.mxu0 0.0
        %397 = vmatprep.subr.mxu0 0.0
        %398 = vmatpush1.msra.mxu0 0.0
        %399 = vmatprep.subr.mxu0 0.0
        %400 = vmatpush1.msra.mxu0 0.0
        %401 = vmatprep.mubr.f32.mxu0 0.0
        %402 = vmatmul.mubr.f32.gmra.mrb[0].mxu0 %v322
        %v403 = vpop.f32.mrb[0].mxu0
        %v404 = vadd.f32 %v303, %v403
        %v405 = vpop.f32.mrb[0].mxu0
        %406 = vmatprep.mubr.f32.mxu0 0.0
        %407 = vmatmul.mubr.f32.gmra.mrb[0].mxu0 %v325
        %v408 = vpop.f32.mrb[0].mxu0
        %v409 = vadd.f32 %v308, %v408
        %v410 = vpop.f32.mrb[0].mxu0
        %411 = vmatprep.mubr.f32.mxu0 0.0
        %412 = vmatmul.mubr.f32.gmra.mrb[0].mxu0 %v328
        %v413 = vpop.f32.mrb[0].mxu0
        %v414 = vadd.f32 %v313, %v413
        %v415 = vpop.f32.mrb[0].mxu0
        %416 = vmatprep.mubr.f32.mxu0 0.0
        %417 = vmatmul.mubr.f32.gmra.mrb[0].mxu0 %v331
        %v418 = vpop.f32.mrb[0].mxu0
        %v419 = vadd.f32 %v318, %v418
        %v420 = vpop.f32.mrb[0].mxu0
        %421 = vdwg.mxu0
        %v422 = vmax.f32 %v404, 0.0
        %v423 = vmax.f32 %v409, 0.0
        %v424 = vmax.f32 %v414, 0.0
        %v425 = vmax.f32 %v419, 0.0
        %vm426 = vcmask 261120
        %427 = vst.msk [vmem:[#allocation2] sm:$0xff] %vm426, %v422
        %428 = vst.msk [vmem:[#allocation2 + $0x8] sm:$0xff] %vm426, %v423
        %429 = vst.msk [vmem:[#allocation2 + $0x10] sm:$0xff] %vm426, %v424
        %430 = vst.msk [vmem:[#allocation2 + $0x18] sm:$0xff] %vm426, %v425
      $region44: #{tpu_custom_call.1} parent=39 // pred_fallthru
        _
      %v431 = vld [vmem:[%s270] sm:$0xff]
      %v432 = vld [vmem:[%s274] sm:$0x1f]
      %v433 = vld [vmem:[#allocation2] sm:$0xff]
      %v434 = vld [vmem:[#allocation2 + $0x8] sm:$0xff]
      %v435 = vld [vmem:[#allocation2 + $0x10] sm:$0xff]
      %v436 = vld [vmem:[#allocation2 + $0x18] sm:$0xff]
      %vm437 = vcmask 39936
      %v439 = vsel %vm437, %v431, 0
      %vm441 = vcmask 1044480
      %v443 = vsel %vm441, %v432, 0
      %445 = vmatprep.subr.mxu0 0.0
      %446 = vmatpush1.msra.mxu0 %v443
      %447 = vmatprep.subr.mxu0 0.0
      %448 = vmatpush1.msra.mxu0 0.0
      %449 = vmatprep.subr.mxu0 0.0
      %450 = vmatpush1.msra.mxu0 0.0
      %451 = vmatprep.subr.mxu0 0.0
      %452 = vmatpush1.msra.mxu0 0.0
      %453 = vmatprep.subr.mxu0 0.0
      %454 = vmatpush1.msra.mxu0 0.0
      %455 = vmatprep.subr.mxu0 0.0
      %456 = vmatpush1.msra.mxu0 0.0
      %457 = vmatprep.subr.mxu0 0.0
      %458 = vmatpush1.msra.mxu0 0.0
      %459 = vmatprep.subr.mxu0 0.0
      %460 = vmatpush1.msra.mxu0 0.0
      %461 = vmatprep.subr.mxu0 0.0
      %462 = vmatpush1.msra.mxu0 0.0
      %463 = vmatprep.subr.mxu0 0.0
      %464 = vmatpush1.msra.mxu0 0.0
      %465 = vmatprep.subr.mxu0 0.0
      %466 = vmatpush1.msra.mxu0 0.0
      %467 = vmatprep.subr.mxu0 0.0
      %468 = vmatpush1.msra.mxu0 0.0
      %469 = vmatprep.subr.mxu0 0.0
      %470 = vmatpush1.msra.mxu0 0.0
      %471 = vmatprep.subr.mxu0 0.0
      %472 = vmatpush1.msra.mxu0 0.0
      %473 = vmatprep.subr.mxu0 0.0
      %474 = vmatpush1.msra.mxu0 0.0
      %475 = vmatprep.subr.mxu0 0.0
      %476 = vmatpush1.msra.mxu0 0.0
      %477 = vmatprep.subr.mxu0 0.0
      %478 = vmatpush1.msra.mxu0 0.0
      %479 = vmatprep.subr.mxu0 0.0
      %480 = vmatpush1.msra.mxu0 0.0
      %481 = vmatprep.subr.mxu0 0.0
      %482 = vmatpush1.msra.mxu0 0.0
      %483 = vmatprep.subr.mxu0 0.0
      %484 = vmatpush1.msra.mxu0 0.0
      %485 = vmatprep.subr.mxu0 0.0
      %486 = vmatpush1.msra.mxu0 0.0
      %487 = vmatprep.subr.mxu0 0.0
      %488 = vmatpush1.msra.mxu0 0.0
      %489 = vmatprep.subr.mxu0 0.0
      %490 = vmatpush1.msra.mxu0 0.0
      %491 = vmatprep.subr.mxu0 0.0
      %492 = vmatpush1.msra.mxu0 0.0
      %493 = vmatprep.subr.mxu0 0.0
      %494 = vmatpush1.msra.mxu0 0.0
      %495 = vmatprep.subr.mxu0 0.0
      %496 = vmatpush1.msra.mxu0 0.0
      %497 = vmatprep.subr.mxu0 0.0
      %498 = vmatpush1.msra.mxu0 0.0
      %499 = vmatprep.subr.mxu0 0.0
      %500 = vmatpush1.msra.mxu0 0.0
      %501 = vmatprep.subr.mxu0 0.0
      %502 = vmatpush1.msra.mxu0 0.0
      %503 = vmatprep.subr.mxu0 0.0
      %504 = vmatpush1.msra.mxu0 0.0
      %505 = vmatprep.subr.mxu0 0.0
      %506 = vmatpush1.msra.mxu0 0.0
      %507 = vmatprep.subr.mxu0 0.0
      %508 = vmatpush1.msra.mxu0 0.0
      %509 = vmatprep.mubr.f32.mxu0 0.0
      %510 = vmatmul.mubr.f32.gmra.mrb[0].mxu0 %v439
      %v511 = vpop.f32.mrb[0].mxu0
      %v512 = vadd.f32 0.0, %v511
      %v513 = vpop.f32.mrb[0].mxu0
      %514 = vdwg.mxu0
      %v515 = vmax.f32 %v512, 0.0
      %v516 = vlaneseq
      %v517 = vand.u32 %v516, 127
      %v519 = vand.u32 %v515, 4294967264
      %v520 = vor.u32 %v519, %v517
      %vm522 = vcmask 261120
      %v523 = vsel %vm522, %v520, inf
      %524 = vmin.xlane.f32.xlu0 %v523
      %v525 = vpop.xlane.xlu0 %524
      %vm526 = vcmp.eq.f32.partialorder %v520, %v525
      %v527 = vsel %vm526, 1, 0
      %v528 = vcvt.s32.f32 %v527
      %v530 = vsel %vm522, %v433, 0
      %v533 = vsel %vm522, %v434, 0
      %v536 = vsel %vm522, %v435, 0
      %v539 = vsel %vm522, %v436, 0
      %v542 = vsel %vm522, %v528, 0
      %544 = vmatprep.subr.mxu0 0.0
      %545 = vmatpush1.xpose.msra.mxu0 %v542
      %546 = vmatprep.subr.mxu0 0.0
      %547 = vmatpush1.xpose.msra.mxu0 0.0
      %548 = vmatprep.subr.mxu0 0.0
      %549 = vmatpush1.xpose.msra.mxu0 0.0
      %550 = vmatprep.subr.mxu0 0.0
      %551 = vmatpush1.xpose.msra.mxu0 0.0
      %552 = vmatprep.subr.mxu0 0.0
      %553 = vmatpush1.xpose.msra.mxu0 0.0
      %554 = vmatprep.subr.mxu0 0.0
      %555 = vmatpush1.xpose.msra.mxu0 0.0
      %556 = vmatprep.subr.mxu0 0.0
      %557 = vmatpush1.xpose.msra.mxu0 0.0
      %558 = vmatprep.subr.mxu0 0.0
      %559 = vmatpush1.xpose.msra.mxu0 0.0
      %560 = vmatprep.subr.mxu0 0.0
      %561 = vmatpush1.xpose.msra.mxu0 0.0
      %562 = vmatprep.subr.mxu0 0.0
      %563 = vmatpush1.xpose.msra.mxu0 0.0
      %564 = vmatprep.subr.mxu0 0.0
      %565 = vmatpush1.xpose.msra.mxu0 0.0
      %566 = vmatprep.subr.mxu0 0.0
      %567 = vmatpush1.xpose.msra.mxu0 0.0
      %568 = vmatprep.subr.mxu0 0.0
      %569 = vmatpush1.xpose.msra.mxu0 0.0
      %570 = vmatprep.subr.mxu0 0.0
      %571 = vmatpush1.xpose.msra.mxu0 0.0
      %572 = vmatprep.subr.mxu0 0.0
      %573 = vmatpush1.xpose.msra.mxu0 0.0
      %574 = vmatprep.subr.mxu0 0.0
      %575 = vmatpush1.xpose.msra.mxu0 0.0
      %576 = vmatprep.subr.mxu0 0.0
      %577 = vmatpush1.xpose.msra.mxu0 0.0
      %578 = vmatprep.subr.mxu0 0.0
      %579 = vmatpush1.xpose.msra.mxu0 0.0
      %580 = vmatprep.subr.mxu0 0.0
      %581 = vmatpush1.xpose.msra.mxu0 0.0
      %582 = vmatprep.subr.mxu0 0.0
      %583 = vmatpush1.xpose.msra.mxu0 0.0
      %584 = vmatprep.subr.mxu0 0.0
      %585 = vmatpush1.xpose.msra.mxu0 0.0
      %586 = vmatprep.subr.mxu0 0.0
      %587 = vmatpush1.xpose.msra.mxu0 0.0
      %588 = vmatprep.subr.mxu0 0.0
      %589 = vmatpush1.xpose.msra.mxu0 0.0
      %590 = vmatprep.subr.mxu0 0.0
      %591 = vmatpush1.xpose.msra.mxu0 0.0
      %592 = vmatprep.subr.mxu0 0.0
      %593 = vmatpush1.xpose.msra.mxu0 0.0
      %594 = vmatprep.subr.mxu0 0.0
      %595 = vmatpush1.xpose.msra.mxu0 0.0
      %596 = vmatprep.subr.mxu0 0.0
      %597 = vmatpush1.xpose.msra.mxu0 0.0
      %598 = vmatprep.subr.mxu0 0.0
      %599 = vmatpush1.xpose.msra.mxu0 0.0
      %600 = vmatprep.subr.mxu0 0.0
      %601 = vmatpush1.xpose.msra.mxu0 0.0
      %602 = vmatprep.subr.mxu0 0.0
      %603 = vmatpush1.xpose.msra.mxu0 0.0
      %604 = vmatprep.subr.mxu0 0.0
      %605 = vmatpush1.xpose.msra.mxu0 0.0
      %606 = vmatprep.subr.mxu0 0.0
      %607 = vmatpush1.xpose.msra.mxu0 0.0
      %608 = vmatprep.mubr.f32.mxu0 0.0
      %609 = vmatmul.mubr.f32.gmra.mrb[0].mxu0 %v530
      %v610 = vpop.f32.mrb[0].mxu0
      %v611 = vadd.f32 0.0, %v610
      %v612 = vpop.f32.mrb[0].mxu0
      %613 = vmatprep.mubr.f32.mxu0 0.0
      %614 = vmatmul.mubr.f32.gmra.mrb[0].mxu0 %v533
      %v615 = vpop.f32.mrb[0].mxu0
      %v616 = vadd.f32 0.0, %v615
      %v617 = vpop.f32.mrb[0].mxu0
      %618 = vmatprep.mubr.f32.mxu0 0.0
      %619 = vmatmul.mubr.f32.gmra.mrb[0].mxu0 %v536
      %v620 = vpop.f32.mrb[0].mxu0
      %v621 = vadd.f32 0.0, %v620
      %v622 = vpop.f32.mrb[0].mxu0
      %623 = vmatprep.mubr.f32.mxu0 0.0
      %624 = vmatmul.mubr.f32.gmra.mrb[0].mxu0 %v539
      %v625 = vpop.f32.mrb[0].mxu0
      %v626 = vadd.f32 0.0, %v625
      %v627 = vpop.f32.mrb[0].mxu0
      %628 = vdwg.mxu0
      %v629 = vsel %vm526, inf, %v520
      %v630 = vsel %vm522, %v629, inf
      %631 = vmin.xlane.f32.xlu0 %v630
      %v632 = vpop.xlane.xlu0 %631
      %vm633 = vcmp.eq.f32.partialorder %v629, %v632
      %v634 = vsel %vm633, 1, 0
      %v635 = vcvt.s32.f32 %v634
      %v637 = vsel %vm522, %v635, 0
      %639 = vmatprep.subr.mxu0 0.0
      %640 = vmatpush1.xpose.msra.mxu0 %v637
      %641 = vmatprep.subr.mxu0 0.0
      %642 = vmatpush1.xpose.msra.mxu0 0.0
      %643 = vmatprep.subr.mxu0 0.0
      %644 = vmatpush1.xpose.msra.mxu0 0.0
      %645 = vmatprep.subr.mxu0 0.0
      %646 = vmatpush1.xpose.msra.mxu0 0.0
      %647 = vmatprep.subr.mxu0 0.0
      %648 = vmatpush1.xpose.msra.mxu0 0.0
      %649 = vmatprep.subr.mxu0 0.0
      %650 = vmatpush1.xpose.msra.mxu0 0.0
      %651 = vmatprep.subr.mxu0 0.0
      %652 = vmatpush1.xpose.msra.mxu0 0.0
      %653 = vmatprep.subr.mxu0 0.0
      %654 = vmatpush1.xpose.msra.mxu0 0.0
      %655 = vmatprep.subr.mxu0 0.0
      %656 = vmatpush1.xpose.msra.mxu0 0.0
      %657 = vmatprep.subr.mxu0 0.0
      %658 = vmatpush1.xpose.msra.mxu0 0.0
      %659 = vmatprep.subr.mxu0 0.0
      %660 = vmatpush1.xpose.msra.mxu0 0.0
      %661 = vmatprep.subr.mxu0 0.0
      %662 = vmatpush1.xpose.msra.mxu0 0.0
      %663 = vmatprep.subr.mxu0 0.0
      %664 = vmatpush1.xpose.msra.mxu0 0.0
      %665 = vmatprep.subr.mxu0 0.0
      %666 = vmatpush1.xpose.msra.mxu0 0.0
      %667 = vmatprep.subr.mxu0 0.0
      %668 = vmatpush1.xpose.msra.mxu0 0.0
      %669 = vmatprep.subr.mxu0 0.0
      %670 = vmatpush1.xpose.msra.mxu0 0.0
      %671 = vmatprep.subr.mxu0 0.0
      %672 = vmatpush1.xpose.msra.mxu0 0.0
      %673 = vmatprep.subr.mxu0 0.0
      %674 = vmatpush1.xpose.msra.mxu0 0.0
      %675 = vmatprep.subr.mxu0 0.0
      %676 = vmatpush1.xpose.msra.mxu0 0.0
      %677 = vmatprep.subr.mxu0 0.0
      %678 = vmatpush1.xpose.msra.mxu0 0.0
      %679 = vmatprep.subr.mxu0 0.0
      %680 = vmatpush1.xpose.msra.mxu0 0.0
      %681 = vmatprep.subr.mxu0 0.0
      %682 = vmatpush1.xpose.msra.mxu0 0.0
      %683 = vmatprep.subr.mxu0 0.0
      %684 = vmatpush1.xpose.msra.mxu0 0.0
      %685 = vmatprep.subr.mxu0 0.0
      %686 = vmatpush1.xpose.msra.mxu0 0.0
      %687 = vmatprep.subr.mxu0 0.0
      %688 = vmatpush1.xpose.msra.mxu0 0.0
      %689 = vmatprep.subr.mxu0 0.0
      %690 = vmatpush1.xpose.msra.mxu0 0.0
      %691 = vmatprep.subr.mxu0 0.0
      %692 = vmatpush1.xpose.msra.mxu0 0.0
      %693 = vmatprep.subr.mxu0 0.0
      %694 = vmatpush1.xpose.msra.mxu0 0.0
      %695 = vmatprep.subr.mxu0 0.0
      %696 = vmatpush1.xpose.msra.mxu0 0.0
      %697 = vmatprep.subr.mxu0 0.0
      %698 = vmatpush1.xpose.msra.mxu0 0.0
      %699 = vmatprep.subr.mxu0 0.0
      %700 = vmatpush1.xpose.msra.mxu0 0.0
      %701 = vmatprep.subr.mxu0 0.0
      %702 = vmatpush1.xpose.msra.mxu0 0.0
      %703 = vmatprep.mubr.f32.mxu0 0.0
      %704 = vmatmul.mubr.f32.gmra.mrb[0].mxu0 %v530
      %v705 = vpop.f32.mrb[0].mxu0
      %v706 = vadd.f32 0.0, %v705
      %v707 = vpop.f32.mrb[0].mxu0
      %708 = vmatprep.mubr.f32.mxu0 0.0
      %709 = vmatmul.mubr.f32.gmra.mrb[0].mxu0 %v533
      %v710 = vpop.f32.mrb[0].mxu0
      %v711 = vadd.f32 0.0, %v710
      %v712 = vpop.f32.mrb[0].mxu0
      %713 = vmatprep.mubr.f32.mxu0 0.0
      %714 = vmatmul.mubr.f32.gmra.mrb[0].mxu0 %v536
      %v715 = vpop.f32.mrb[0].mxu0
      %v716 = vadd.f32 0.0, %v715
      %v717 = vpop.f32.mrb[0].mxu0
      %718 = vmatprep.mubr.f32.mxu0 0.0
      %719 = vmatmul.mubr.f32.gmra.mrb[0].mxu0 %v539
      %v720 = vpop.f32.mrb[0].mxu0
      %v721 = vadd.f32 0.0, %v720
      %v722 = vpop.f32.mrb[0].mxu0
      %723 = vdwg.mxu0
      %v724 = vmax.f32 %v611, %v706
      %v725 = vmax.f32 %v616, %v711
      %v726 = vmax.f32 %v621, %v716
      %v727 = vmax.f32 %v626, %v721
      %v728 = vsel %vm633, inf, %v629
      %v729 = vsel %vm522, %v728, inf
      %730 = vmin.xlane.f32.xlu0 %v729
      %v731 = vpop.xlane.xlu0 %730
      %vm732 = vcmp.eq.f32.partialorder %v728, %v731
      %v733 = vsel %vm732, 1, 0
      %v734 = vcvt.s32.f32 %v733
      %v736 = vsel %vm522, %v734, 0
      %738 = vmatprep.subr.mxu0 0.0
      %739 = vmatpush1.xpose.msra.mxu0 %v736
      %740 = vmatprep.subr.mxu0 0.0
      %741 = vmatpush1.xpose.msra.mxu0 0.0
      %742 = vmatprep.subr.mxu0 0.0
      %743 = vmatpush1.xpose.msra.mxu0 0.0
      %744 = vmatprep.subr.mxu0 0.0
      %745 = vmatpush1.xpose.msra.mxu0 0.0
      %746 = vmatprep.subr.mxu0 0.0
      %747 = vmatpush1.xpose.msra.mxu0 0.0
      %748 = vmatprep.subr.mxu0 0.0
      %749 = vmatpush1.xpose.msra.mxu0 0.0
      %750 = vmatprep.subr.mxu0 0.0
      %751 = vmatpush1.xpose.msra.mxu0 0.0
      %752 = vmatprep.subr.mxu0 0.0
      %753 = vmatpush1.xpose.msra.mxu0 0.0
      %754 = vmatprep.subr.mxu0 0.0
      %755 = vmatpush1.xpose.msra.mxu0 0.0
      %756 = vmatprep.subr.mxu0 0.0
      %757 = vmatpush1.xpose.msra.mxu0 0.0
      %758 = vmatprep.subr.mxu0 0.0
      %759 = vmatpush1.xpose.msra.mxu0 0.0
      %760 = vmatprep.subr.mxu0 0.0
      %761 = vmatpush1.xpose.msra.mxu0 0.0
      %762 = vmatprep.subr.mxu0 0.0
      %763 = vmatpush1.xpose.msra.mxu0 0.0
      %764 = vmatprep.subr.mxu0 0.0
      %765 = vmatpush1.xpose.msra.mxu0 0.0
      %766 = vmatprep.subr.mxu0 0.0
      %767 = vmatpush1.xpose.msra.mxu0 0.0
      %768 = vmatprep.subr.mxu0 0.0
      %769 = vmatpush1.xpose.msra.mxu0 0.0
      %770 = vmatprep.subr.mxu0 0.0
      %771 = vmatpush1.xpose.msra.mxu0 0.0
      %772 = vmatprep.subr.mxu0 0.0
      %773 = vmatpush1.xpose.msra.mxu0 0.0
      %774 = vmatprep.subr.mxu0 0.0
      %775 = vmatpush1.xpose.msra.mxu0 0.0
      %776 = vmatprep.subr.mxu0 0.0
      %777 = vmatpush1.xpose.msra.mxu0 0.0
      %778 = vmatprep.subr.mxu0 0.0
      %779 = vmatpush1.xpose.msra.mxu0 0.0
      %780 = vmatprep.subr.mxu0 0.0
      %781 = vmatpush1.xpose.msra.mxu0 0.0
      %782 = vmatprep.subr.mxu0 0.0
      %783 = vmatpush1.xpose.msra.mxu0 0.0
      %784 = vmatprep.subr.mxu0 0.0
      %785 = vmatpush1.xpose.msra.mxu0 0.0
      %786 = vmatprep.subr.mxu0 0.0
      %787 = vmatpush1.xpose.msra.mxu0 0.0
      %788 = vmatprep.subr.mxu0 0.0
      %789 = vmatpush1.xpose.msra.mxu0 0.0
      %790 = vmatprep.subr.mxu0 0.0
      %791 = vmatpush1.xpose.msra.mxu0 0.0
      %792 = vmatprep.subr.mxu0 0.0
      %793 = vmatpush1.xpose.msra.mxu0 0.0
      %794 = vmatprep.subr.mxu0 0.0
      %795 = vmatpush1.xpose.msra.mxu0 0.0
      %796 = vmatprep.subr.mxu0 0.0
      %797 = vmatpush1.xpose.msra.mxu0 0.0
      %798 = vmatprep.subr.mxu0 0.0
      %799 = vmatpush1.xpose.msra.mxu0 0.0
      %800 = vmatprep.subr.mxu0 0.0
      %801 = vmatpush1.xpose.msra.mxu0 0.0
      %802 = vmatprep.mubr.f32.mxu0 0.0
      %803 = vmatmul.mubr.f32.gmra.mrb[0].mxu0 %v530
      %v804 = vpop.f32.mrb[0].mxu0
      %v805 = vadd.f32 0.0, %v804
      %v806 = vpop.f32.mrb[0].mxu0
      %807 = vmatprep.mubr.f32.mxu0 0.0
      %808 = vmatmul.mubr.f32.gmra.mrb[0].mxu0 %v533
      %v809 = vpop.f32.mrb[0].mxu0
      %v810 = vadd.f32 0.0, %v809
      %v811 = vpop.f32.mrb[0].mxu0
      %812 = vmatprep.mubr.f32.mxu0 0.0
      %813 = vmatmul.mubr.f32.gmra.mrb[0].mxu0 %v536
      %v814 = vpop.f32.mrb[0].mxu0
      %v815 = vadd.f32 0.0, %v814
      %v816 = vpop.f32.mrb[0].mxu0
      %817 = vmatprep.mubr.f32.mxu0 0.0
      %818 = vmatmul.mubr.f32.gmra.mrb[0].mxu0 %v539
      %v819 = vpop.f32.mrb[0].mxu0
      %v820 = vadd.f32 0.0, %v819
      %v821 = vpop.f32.mrb[0].mxu0
      %822 = vdwg.mxu0
      %v823 = vmax.f32 %v724, %v805
      %v824 = vmax.f32 %v725, %v810
      %v825 = vmax.f32 %v726, %v815
      %v826 = vmax.f32 %v727, %v820
      %v827 = vsel %vm732, inf, %v728
      %v828 = vsel %vm522, %v827, inf
      %829 = vmin.xlane.f32.xlu0 %v828
      %v830 = vpop.xlane.xlu0 %829
      %vm831 = vcmp.eq.f32.partialorder %v827, %v830
      %v832 = vsel %vm831, 1, 0
      %v833 = vcvt.s32.f32 %v832
      %v835 = vsel %vm522, %v833, 0
      %837 = vmatprep.subr.mxu0 0.0
      %838 = vmatpush1.xpose.msra.mxu0 %v835
      %839 = vmatprep.subr.mxu0 0.0
      %840 = vmatpush1.xpose.msra.mxu0 0.0
      %841 = vmatprep.subr.mxu0 0.0
      %842 = vmatpush1.xpose.msra.mxu0 0.0
      %843 = vmatprep.subr.mxu0 0.0
      %844 = vmatpush1.xpose.msra.mxu0 0.0
      %845 = vmatprep.subr.mxu0 0.0
      %846 = vmatpush1.xpose.msra.mxu0 0.0
      %847 = vmatprep.subr.mxu0 0.0
      %848 = vmatpush1.xpose.msra.mxu0 0.0
      %849 = vmatprep.subr.mxu0 0.0
      %850 = vmatpush1.xpose.msra.mxu0 0.0
      %851 = vmatprep.subr.mxu0 0.0
      %852 = vmatpush1.xpose.msra.mxu0 0.0
      %853 = vmatprep.subr.mxu0 0.0
      %854 = vmatpush1.xpose.msra.mxu0 0.0
      %855 = vmatprep.subr.mxu0 0.0
      %856 = vmatpush1.xpose.msra.mxu0 0.0
      %857 = vmatprep.subr.mxu0 0.0
      %858 = vmatpush1.xpose.msra.mxu0 0.0
      %859 = vmatprep.subr.mxu0 0.0
      %860 = vmatpush1.xpose.msra.mxu0 0.0
      %861 = vmatprep.subr.mxu0 0.0
      %862 = vmatpush1.xpose.msra.mxu0 0.0
      %863 = vmatprep.subr.mxu0 0.0
      %864 = vmatpush1.xpose.msra.mxu0 0.0
      %865 = vmatprep.subr.mxu0 0.0
      %866 = vmatpush1.xpose.msra.mxu0 0.0
      %867 = vmatprep.subr.mxu0 0.0
      %868 = vmatpush1.xpose.msra.mxu0 0.0
      %869 = vmatprep.subr.mxu0 0.0
      %870 = vmatpush1.xpose.msra.mxu0 0.0
      %871 = vmatprep.subr.mxu0 0.0
      %872 = vmatpush1.xpose.msra.mxu0 0.0
      %873 = vmatprep.subr.mxu0 0.0
      %874 = vmatpush1.xpose.msra.mxu0 0.0
      %875 = vmatprep.subr.mxu0 0.0
      %876 = vmatpush1.xpose.msra.mxu0 0.0
      %877 = vmatprep.subr.mxu0 0.0
      %878 = vmatpush1.xpose.msra.mxu0 0.0
      %879 = vmatprep.subr.mxu0 0.0
      %880 = vmatpush1.xpose.msra.mxu0 0.0
      %881 = vmatprep.subr.mxu0 0.0
      %882 = vmatpush1.xpose.msra.mxu0 0.0
      %883 = vmatprep.subr.mxu0 0.0
      %884 = vmatpush1.xpose.msra.mxu0 0.0
      %885 = vmatprep.subr.mxu0 0.0
      %886 = vmatpush1.xpose.msra.mxu0 0.0
      %887 = vmatprep.subr.mxu0 0.0
      %888 = vmatpush1.xpose.msra.mxu0 0.0
      %889 = vmatprep.subr.mxu0 0.0
      %890 = vmatpush1.xpose.msra.mxu0 0.0
      %891 = vmatprep.subr.mxu0 0.0
      %892 = vmatpush1.xpose.msra.mxu0 0.0
      %893 = vmatprep.subr.mxu0 0.0
      %894 = vmatpush1.xpose.msra.mxu0 0.0
      %895 = vmatprep.subr.mxu0 0.0
      %896 = vmatpush1.xpose.msra.mxu0 0.0
      %897 = vmatprep.subr.mxu0 0.0
      %898 = vmatpush1.xpose.msra.mxu0 0.0
      %899 = vmatprep.subr.mxu0 0.0
      %900 = vmatpush1.xpose.msra.mxu0 0.0
      %901 = vmatprep.mubr.f32.mxu0 0.0
      %902 = vmatmul.mubr.f32.gmra.mrb[0].mxu0 %v530
      %v903 = vpop.f32.mrb[0].mxu0
      %v904 = vadd.f32 0.0, %v903
      %v905 = vpop.f32.mrb[0].mxu0
      %906 = vmatprep.mubr.f32.mxu0 0.0
      %907 = vmatmul.mubr.f32.gmra.mrb[0].mxu0 %v533
      %v908 = vpop.f32.mrb[0].mxu0
      %v909 = vadd.f32 0.0, %v908
      %v910 = vpop.f32.mrb[0].mxu0
      %911 = vmatprep.mubr.f32.mxu0 0.0
      %912 = vmatmul.mubr.f32.gmra.mrb[0].mxu0 %v536
      %v913 = vpop.f32.mrb[0].mxu0
      %v914 = vadd.f32 0.0, %v913
      %v915 = vpop.f32.mrb[0].mxu0
      %916 = vmatprep.mubr.f32.mxu0 0.0
      %917 = vmatmul.mubr.f32.gmra.mrb[0].mxu0 %v539
      %v918 = vpop.f32.mrb[0].mxu0
      %v919 = vadd.f32 0.0, %v918
      %v920 = vpop.f32.mrb[0].mxu0
      %921 = vdwg.mxu0
      %v922 = vmax.f32 %v823, %v904
      %v923 = vmax.f32 %v824, %v909
      %v924 = vmax.f32 %v825, %v914
      %v925 = vmax.f32 %v826, %v919
      %v926 = vsel %vm831, inf, %v827
      %v927 = vsel %vm522, %v926, inf
      %928 = vmin.xlane.f32.xlu0 %v927
      %v929 = vpop.xlane.xlu0 %928
      %vm930 = vcmp.eq.f32.partialorder %v926, %v929
      %v931 = vsel %vm930, 1, 0
      %v932 = vcvt.s32.f32 %v931
      %v934 = vsel %vm522, %v932, 0
      %936 = vmatprep.subr.mxu0 0.0
      %937 = vmatpush1.xpose.msra.mxu0 %v934
      %938 = vmatprep.subr.mxu0 0.0
      %939 = vmatpush1.xpose.msra.mxu0 0.0
      %940 = vmatprep.subr.mxu0 0.0
      %941 = vmatpush1.xpose.msra.mxu0 0.0
      %942 = vmatprep.subr.mxu0 0.0
      %943 = vmatpush1.xpose.msra.mxu0 0.0
      %944 = vmatprep.subr.mxu0 0.0
      %945 = vmatpush1.xpose.msra.mxu0 0.0
      %946 = vmatprep.subr.mxu0 0.0
      %947 = vmatpush1.xpose.msra.mxu0 0.0
      %948 = vmatprep.subr.mxu0 0.0
      %949 = vmatpush1.xpose.msra.mxu0 0.0
      %950 = vmatprep.subr.mxu0 0.0
      %951 = vmatpush1.xpose.msra.mxu0 0.0
      %952 = vmatprep.subr.mxu0 0.0
      %953 = vmatpush1.xpose.msra.mxu0 0.0
      %954 = vmatprep.subr.mxu0 0.0
      %955 = vmatpush1.xpose.msra.mxu0 0.0
      %956 = vmatprep.subr.mxu0 0.0
      %957 = vmatpush1.xpose.msra.mxu0 0.0
      %958 = vmatprep.subr.mxu0 0.0
      %959 = vmatpush1.xpose.msra.mxu0 0.0
      %960 = vmatprep.subr.mxu0 0.0
      %961 = vmatpush1.xpose.msra.mxu0 0.0
      %962 = vmatprep.subr.mxu0 0.0
      %963 = vmatpush1.xpose.msra.mxu0 0.0
      %964 = vmatprep.subr.mxu0 0.0
      %965 = vmatpush1.xpose.msra.mxu0 0.0
      %966 = vmatprep.subr.mxu0 0.0
      %967 = vmatpush1.xpose.msra.mxu0 0.0
      %968 = vmatprep.subr.mxu0 0.0
      %969 = vmatpush1.xpose.msra.mxu0 0.0
      %970 = vmatprep.subr.mxu0 0.0
      %971 = vmatpush1.xpose.msra.mxu0 0.0
      %972 = vmatprep.subr.mxu0 0.0
      %973 = vmatpush1.xpose.msra.mxu0 0.0
      %974 = vmatprep.subr.mxu0 0.0
      %975 = vmatpush1.xpose.msra.mxu0 0.0
      %976 = vmatprep.subr.mxu0 0.0
      %977 = vmatpush1.xpose.msra.mxu0 0.0
      %978 = vmatprep.subr.mxu0 0.0
      %979 = vmatpush1.xpose.msra.mxu0 0.0
      %980 = vmatprep.subr.mxu0 0.0
      %981 = vmatpush1.xpose.msra.mxu0 0.0
      %982 = vmatprep.subr.mxu0 0.0
      %983 = vmatpush1.xpose.msra.mxu0 0.0
      %984 = vmatprep.subr.mxu0 0.0
      %985 = vmatpush1.xpose.msra.mxu0 0.0
      %986 = vmatprep.subr.mxu0 0.0
      %987 = vmatpush1.xpose.msra.mxu0 0.0
      %988 = vmatprep.subr.mxu0 0.0
      %989 = vmatpush1.xpose.msra.mxu0 0.0
      %990 = vmatprep.subr.mxu0 0.0
      %991 = vmatpush1.xpose.msra.mxu0 0.0
      %992 = vmatprep.subr.mxu0 0.0
      %993 = vmatpush1.xpose.msra.mxu0 0.0
      %994 = vmatprep.subr.mxu0 0.0
      %995 = vmatpush1.xpose.msra.mxu0 0.0
      %996 = vmatprep.subr.mxu0 0.0
      %997 = vmatpush1.xpose.msra.mxu0 0.0
      %998 = vmatprep.subr.mxu0 0.0
      %999 = vmatpush1.xpose.msra.mxu0 0.0
      %1000 = vmatprep.mubr.f32.mxu0 0.0
      %1001 = vmatmul.mubr.f32.gmra.mrb[0].mxu0 %v530
      %v1002 = vpop.f32.mrb[0].mxu0
      %v1003 = vadd.f32 0.0, %v1002
      %v1004 = vpop.f32.mrb[0].mxu0
      %1005 = vmatprep.mubr.f32.mxu0 0.0
      %1006 = vmatmul.mubr.f32.gmra.mrb[0].mxu0 %v533
      %v1007 = vpop.f32.mrb[0].mxu0
      %v1008 = vadd.f32 0.0, %v1007
      %v1009 = vpop.f32.mrb[0].mxu0
      %1010 = vmatprep.mubr.f32.mxu0 0.0
      %1011 = vmatmul.mubr.f32.gmra.mrb[0].mxu0 %v536
      %v1012 = vpop.f32.mrb[0].mxu0
      %v1013 = vadd.f32 0.0, %v1012
      %v1014 = vpop.f32.mrb[0].mxu0
      %1015 = vmatprep.mubr.f32.mxu0 0.0
      %1016 = vmatmul.mubr.f32.gmra.mrb[0].mxu0 %v539
      %v1017 = vpop.f32.mrb[0].mxu0
      %v1018 = vadd.f32 0.0, %v1017
      %v1019 = vpop.f32.mrb[0].mxu0
      %1020 = vdwg.mxu0
      %v1021 = vmax.f32 %v922, %v1003
      %v1022 = vmax.f32 %v923, %v1008
      %v1023 = vmax.f32 %v924, %v1013
      %v1024 = vmax.f32 %v925, %v1018
      %v1025 = vsel %vm930, inf, %v926
      %v1026 = vsel %vm522, %v1025, inf
      %1027 = vmin.xlane.f32.xlu0 %v1026
      %v1028 = vpop.xlane.xlu0 %1027
      %vm1029 = vcmp.eq.f32.partialorder %v1025, %v1028
      %v1030 = vsel %vm1029, 1, 0
      %v1031 = vcvt.s32.f32 %v1030
      %v1033 = vsel %vm522, %v1031, 0
      %1035 = vmatprep.subr.mxu0 0.0
      %1036 = vmatpush1.xpose.msra.mxu0 %v1033
      %1037 = vmatprep.subr.mxu0 0.0
      %1038 = vmatpush1.xpose.msra.mxu0 0.0
      %1039 = vmatprep.subr.mxu0 0.0
      %1040 = vmatpush1.xpose.msra.mxu0 0.0
      %1041 = vmatprep.subr.mxu0 0.0
      %1042 = vmatpush1.xpose.msra.mxu0 0.0
      %1043 = vmatprep.subr.mxu0 0.0
      %1044 = vmatpush1.xpose.msra.mxu0 0.0
      %1045 = vmatprep.subr.mxu0 0.0
      %1046 = vmatpush1.xpose.msra.mxu0 0.0
      %1047 = vmatprep.subr.mxu0 0.0
      %1048 = vmatpush1.xpose.msra.mxu0 0.0
      %1049 = vmatprep.subr.mxu0 0.0
      %1050 = vmatpush1.xpose.msra.mxu0 0.0
      %1051 = vmatprep.subr.mxu0 0.0
      %1052 = vmatpush1.xpose.msra.mxu0 0.0
      %1053 = vmatprep.subr.mxu0 0.0
      %1054 = vmatpush1.xpose.msra.mxu0 0.0
      %1055 = vmatprep.subr.mxu0 0.0
      %1056 = vmatpush1.xpose.msra.mxu0 0.0
      %1057 = vmatprep.subr.mxu0 0.0
      %1058 = vmatpush1.xpose.msra.mxu0 0.0
      %1059 = vmatprep.subr.mxu0 0.0
      %1060 = vmatpush1.xpose.msra.mxu0 0.0
      %1061 = vmatprep.subr.mxu0 0.0
      %1062 = vmatpush1.xpose.msra.mxu0 0.0
      %1063 = vmatprep.subr.mxu0 0.0
      %1064 = vmatpush1.xpose.msra.mxu0 0.0
      %1065 = vmatprep.subr.mxu0 0.0
      %1066 = vmatpush1.xpose.msra.mxu0 0.0
      %1067 = vmatprep.subr.mxu0 0.0
      %1068 = vmatpush1.xpose.msra.mxu0 0.0
      %1069 = vmatprep.subr.mxu0 0.0
      %1070 = vmatpush1.xpose.msra.mxu0 0.0
      %1071 = vmatprep.subr.mxu0 0.0
      %1072 = vmatpush1.xpose.msra.mxu0 0.0
      %1073 = vmatprep.subr.mxu0 0.0
      %1074 = vmatpush1.xpose.msra.mxu0 0.0
      %1075 = vmatprep.subr.mxu0 0.0
      %1076 = vmatpush1.xpose.msra.mxu0 0.0
      %1077 = vmatprep.subr.mxu0 0.0
      %1078 = vmatpush1.xpose.msra.mxu0 0.0
      %1079 = vmatprep.subr.mxu0 0.0
      %1080 = vmatpush1.xpose.msra.mxu0 0.0
      %1081 = vmatprep.subr.mxu0 0.0
      %1082 = vmatpush1.xpose.msra.mxu0 0.0
      %1083 = vmatprep.subr.mxu0 0.0
      %1084 = vmatpush1.xpose.msra.mxu0 0.0
      %1085 = vmatprep.subr.mxu0 0.0
      %1086 = vmatpush1.xpose.msra.mxu0 0.0
      %1087 = vmatprep.subr.mxu0 0.0
      %1088 = vmatpush1.xpose.msra.mxu0 0.0
      %1089 = vmatprep.subr.mxu0 0.0
      %1090 = vmatpush1.xpose.msra.mxu0 0.0
      %1091 = vmatprep.subr.mxu0 0.0
      %1092 = vmatpush1.xpose.msra.mxu0 0.0
      %1093 = vmatprep.subr.mxu0 0.0
      %1094 = vmatpush1.xpose.msra.mxu0 0.0
      %1095 = vmatprep.subr.mxu0 0.0
      %1096 = vmatpush1.xpose.msra.mxu0 0.0
      %1097 = vmatprep.subr.mxu0 0.0
      %1098 = vmatpush1.xpose.msra.mxu0 0.0
      %1099 = vmatprep.mubr.f32.mxu0 0.0
      %1100 = vmatmul.mubr.f32.gmra.mrb[0].mxu0 %v530
      %v1101 = vpop.f32.mrb[0].mxu0
      %v1102 = vadd.f32 0.0, %v1101
      %v1103 = vpop.f32.mrb[0].mxu0
      %1104 = vmatprep.mubr.f32.mxu0 0.0
      %1105 = vmatmul.mubr.f32.gmra.mrb[0].mxu0 %v533
      %v1106 = vpop.f32.mrb[0].mxu0
      %v1107 = vadd.f32 0.0, %v1106
      %v1108 = vpop.f32.mrb[0].mxu0
      %1109 = vmatprep.mubr.f32.mxu0 0.0
      %1110 = vmatmul.mubr.f32.gmra.mrb[0].mxu0 %v536
      %v1111 = vpop.f32.mrb[0].mxu0
      %v1112 = vadd.f32 0.0, %v1111
      %v1113 = vpop.f32.mrb[0].mxu0
      %1114 = vmatprep.mubr.f32.mxu0 0.0
      %1115 = vmatmul.mubr.f32.gmra.mrb[0].mxu0 %v539
      %v1116 = vpop.f32.mrb[0].mxu0
      %v1117 = vadd.f32 0.0, %v1116
      %v1118 = vpop.f32.mrb[0].mxu0
      %1119 = vdwg.mxu0
      %v1120 = vmax.f32 %v1021, %v1102
      %v1121 = vmax.f32 %v1022, %v1107
      %v1122 = vmax.f32 %v1023, %v1112
      %v1123 = vmax.f32 %v1024, %v1117
      %v1124 = vsel %vm1029, inf, %v1025
      %v1125 = vsel %vm522, %v1124, inf
      %1126 = vmin.xlane.f32.xlu0 %v1125
      %v1127 = vpop.xlane.xlu0 %1126
      %vm1128 = vcmp.eq.f32.partialorder %v1124, %v1127
      %v1129 = vsel %vm1128, 1, 0
      %v1130 = vcvt.s32.f32 %v1129
      %v1132 = vsel %vm522, %v1130, 0
      %1134 = vmatprep.subr.mxu0 0.0
      %1135 = vmatpush1.xpose.msra.mxu0 %v1132
      %1136 = vmatprep.subr.mxu0 0.0
      %1137 = vmatpush1.xpose.msra.mxu0 0.0
      %1138 = vmatprep.subr.mxu0 0.0
      %1139 = vmatpush1.xpose.msra.mxu0 0.0
      %1140 = vmatprep.subr.mxu0 0.0
      %1141 = vmatpush1.xpose.msra.mxu0 0.0
      %1142 = vmatprep.subr.mxu0 0.0
      %1143 = vmatpush1.xpose.msra.mxu0 0.0
      %1144 = vmatprep.subr.mxu0 0.0
      %1145 = vmatpush1.xpose.msra.mxu0 0.0
      %1146 = vmatprep.subr.mxu0 0.0
      %1147 = vmatpush1.xpose.msra.mxu0 0.0
      %1148 = vmatprep.subr.mxu0 0.0
      %1149 = vmatpush1.xpose.msra.mxu0 0.0
      %1150 = vmatprep.subr.mxu0 0.0
      %1151 = vmatpush1.xpose.msra.mxu0 0.0
      %1152 = vmatprep.subr.mxu0 0.0
      %1153 = vmatpush1.xpose.msra.mxu0 0.0
      %1154 = vmatprep.subr.mxu0 0.0
      %1155 = vmatpush1.xpose.msra.mxu0 0.0
      %1156 = vmatprep.subr.mxu0 0.0
      %1157 = vmatpush1.xpose.msra.mxu0 0.0
      %1158 = vmatprep.subr.mxu0 0.0
      %1159 = vmatpush1.xpose.msra.mxu0 0.0
      %1160 = vmatprep.subr.mxu0 0.0
      %1161 = vmatpush1.xpose.msra.mxu0 0.0
      %1162 = vmatprep.subr.mxu0 0.0
      %1163 = vmatpush1.xpose.msra.mxu0 0.0
      %1164 = vmatprep.subr.mxu0 0.0
      %1165 = vmatpush1.xpose.msra.mxu0 0.0
      %1166 = vmatprep.subr.mxu0 0.0
      %1167 = vmatpush1.xpose.msra.mxu0 0.0
      %1168 = vmatprep.subr.mxu0 0.0
      %1169 = vmatpush1.xpose.msra.mxu0 0.0
      %1170 = vmatprep.subr.mxu0 0.0
      %1171 = vmatpush1.xpose.msra.mxu0 0.0
      %1172 = vmatprep.subr.mxu0 0.0
      %1173 = vmatpush1.xpose.msra.mxu0 0.0
      %1174 = vmatprep.subr.mxu0 0.0
      %1175 = vmatpush1.xpose.msra.mxu0 0.0
      %1176 = vmatprep.subr.mxu0 0.0
      %1177 = vmatpush1.xpose.msra.mxu0 0.0
      %1178 = vmatprep.subr.mxu0 0.0
      %1179 = vmatpush1.xpose.msra.mxu0 0.0
      %1180 = vmatprep.subr.mxu0 0.0
      %1181 = vmatpush1.xpose.msra.mxu0 0.0
      %1182 = vmatprep.subr.mxu0 0.0
      %1183 = vmatpush1.xpose.msra.mxu0 0.0
      %1184 = vmatprep.subr.mxu0 0.0
      %1185 = vmatpush1.xpose.msra.mxu0 0.0
      %1186 = vmatprep.subr.mxu0 0.0
      %1187 = vmatpush1.xpose.msra.mxu0 0.0
      %1188 = vmatprep.subr.mxu0 0.0
      %1189 = vmatpush1.xpose.msra.mxu0 0.0
      %1190 = vmatprep.subr.mxu0 0.0
      %1191 = vmatpush1.xpose.msra.mxu0 0.0
      %1192 = vmatprep.subr.mxu0 0.0
      %1193 = vmatpush1.xpose.msra.mxu0 0.0
      %1194 = vmatprep.subr.mxu0 0.0
      %1195 = vmatpush1.xpose.msra.mxu0 0.0
      %1196 = vmatprep.subr.mxu0 0.0
      %1197 = vmatpush1.xpose.msra.mxu0 0.0
      %1198 = vmatprep.mubr.f32.mxu0 0.0
      %1199 = vmatmul.mubr.f32.gmra.mrb[0].mxu0 %v530
      %v1200 = vpop.f32.mrb[0].mxu0
      %v1201 = vadd.f32 0.0, %v1200
      %v1202 = vpop.f32.mrb[0].mxu0
      %1203 = vmatprep.mubr.f32.mxu0 0.0
      %1204 = vmatmul.mubr.f32.gmra.mrb[0].mxu0 %v533
      %v1205 = vpop.f32.mrb[0].mxu0
      %v1206 = vadd.f32 0.0, %v1205
      %v1207 = vpop.f32.mrb[0].mxu0
      %1208 = vmatprep.mubr.f32.mxu0 0.0
      %1209 = vmatmul.mubr.f32.gmra.mrb[0].mxu0 %v536
      %v1210 = vpop.f32.mrb[0].mxu0
      %v1211 = vadd.f32 0.0, %v1210
      %v1212 = vpop.f32.mrb[0].mxu0
      %1213 = vmatprep.mubr.f32.mxu0 0.0
      %1214 = vmatmul.mubr.f32.gmra.mrb[0].mxu0 %v539
      %v1215 = vpop.f32.mrb[0].mxu0
      %v1216 = vadd.f32 0.0, %v1215
      %v1217 = vpop.f32.mrb[0].mxu0
      %1218 = vdwg.mxu0
      %v1219 = vmax.f32 %v1120, %v1201
      %v1220 = vmax.f32 %v1121, %v1206
      %v1221 = vmax.f32 %v1122, %v1211
      %v1222 = vmax.f32 %v1123, %v1216
      %v1223 = vsel %vm1128, inf, %v1124
      %v1224 = vsel %vm522, %v1223, inf
      %1225 = vmin.xlane.f32.xlu0 %v1224
      %v1226 = vpop.xlane.xlu0 %1225
      %vm1227 = vcmp.eq.f32.partialorder %v1223, %v1226
      %v1228 = vsel %vm1227, 1, 0
      %v1229 = vcvt.s32.f32 %v1228
      %v1231 = vsel %vm522, %v1229, 0
      %1233 = vmatprep.subr.mxu0 0.0
      %1234 = vmatpush1.xpose.msra.mxu0 %v1231
      %1235 = vmatprep.subr.mxu0 0.0
      %1236 = vmatpush1.xpose.msra.mxu0 0.0
      %1237 = vmatprep.subr.mxu0 0.0
      %1238 = vmatpush1.xpose.msra.mxu0 0.0
      %1239 = vmatprep.subr.mxu0 0.0
      %1240 = vmatpush1.xpose.msra.mxu0 0.0
      %1241 = vmatprep.subr.mxu0 0.0
      %1242 = vmatpush1.xpose.msra.mxu0 0.0
      %1243 = vmatprep.subr.mxu0 0.0
      %1244 = vmatpush1.xpose.msra.mxu0 0.0
      %1245 = vmatprep.subr.mxu0 0.0
      %1246 = vmatpush1.xpose.msra.mxu0 0.0
      %1247 = vmatprep.subr.mxu0 0.0
      %1248 = vmatpush1.xpose.msra.mxu0 0.0
      %1249 = vmatprep.subr.mxu0 0.0
      %1250 = vmatpush1.xpose.msra.mxu0 0.0
      %1251 = vmatprep.subr.mxu0 0.0
      %1252 = vmatpush1.xpose.msra.mxu0 0.0
      %1253 = vmatprep.subr.mxu0 0.0
      %1254 = vmatpush1.xpose.msra.mxu0 0.0
      %1255 = vmatprep.subr.mxu0 0.0
      %1256 = vmatpush1.xpose.msra.mxu0 0.0
      %1257 = vmatprep.subr.mxu0 0.0
      %1258 = vmatpush1.xpose.msra.mxu0 0.0
      %1259 = vmatprep.subr.mxu0 0.0
      %1260 = vmatpush1.xpose.msra.mxu0 0.0
      %1261 = vmatprep.subr.mxu0 0.0
      %1262 = vmatpush1.xpose.msra.mxu0 0.0
      %1263 = vmatprep.subr.mxu0 0.0
      %1264 = vmatpush1.xpose.msra.mxu0 0.0
      %1265 = vmatprep.subr.mxu0 0.0
      %1266 = vmatpush1.xpose.msra.mxu0 0.0
      %1267 = vmatprep.subr.mxu0 0.0
      %1268 = vmatpush1.xpose.msra.mxu0 0.0
      %1269 = vmatprep.subr.mxu0 0.0
      %1270 = vmatpush1.xpose.msra.mxu0 0.0
      %1271 = vmatprep.subr.mxu0 0.0
      %1272 = vmatpush1.xpose.msra.mxu0 0.0
      %1273 = vmatprep.subr.mxu0 0.0
      %1274 = vmatpush1.xpose.msra.mxu0 0.0
      %1275 = vmatprep.subr.mxu0 0.0
      %1276 = vmatpush1.xpose.msra.mxu0 0.0
      %1277 = vmatprep.subr.mxu0 0.0
      %1278 = vmatpush1.xpose.msra.mxu0 0.0
      %1279 = vmatprep.subr.mxu0 0.0
      %1280 = vmatpush1.xpose.msra.mxu0 0.0
      %1281 = vmatprep.subr.mxu0 0.0
      %1282 = vmatpush1.xpose.msra.mxu0 0.0
      %1283 = vmatprep.subr.mxu0 0.0
      %1284 = vmatpush1.xpose.msra.mxu0 0.0
      %1285 = vmatprep.subr.mxu0 0.0
      %1286 = vmatpush1.xpose.msra.mxu0 0.0
      %1287 = vmatprep.subr.mxu0 0.0
      %1288 = vmatpush1.xpose.msra.mxu0 0.0
      %1289 = vmatprep.subr.mxu0 0.0
      %1290 = vmatpush1.xpose.msra.mxu0 0.0
      %1291 = vmatprep.subr.mxu0 0.0
      %1292 = vmatpush1.xpose.msra.mxu0 0.0
      %1293 = vmatprep.subr.mxu0 0.0
      %1294 = vmatpush1.xpose.msra.mxu0 0.0
      %1295 = vmatprep.subr.mxu0 0.0
      %1296 = vmatpush1.xpose.msra.mxu0 0.0
      %1297 = vmatprep.mubr.f32.mxu0 0.0
      %1298 = vmatmul.mubr.f32.gmra.mrb[0].mxu0 %v530
      %v1299 = vpop.f32.mrb[0].mxu0
      %v1300 = vadd.f32 0.0, %v1299
      %v1301 = vpop.f32.mrb[0].mxu0
      %1302 = vmatprep.mubr.f32.mxu0 0.0
      %1303 = vmatmul.mubr.f32.gmra.mrb[0].mxu0 %v533
      %v1304 = vpop.f32.mrb[0].mxu0
      %v1305 = vadd.f32 0.0, %v1304
      %v1306 = vpop.f32.mrb[0].mxu0
      %1307 = vmatprep.mubr.f32.mxu0 0.0
      %1308 = vmatmul.mubr.f32.gmra.mrb[0].mxu0 %v536
      %v1309 = vpop.f32.mrb[0].mxu0
      %v1310 = vadd.f32 0.0, %v1309
      %v1311 = vpop.f32.mrb[0].mxu0
      %1312 = vmatprep.mubr.f32.mxu0 0.0
      %1313 = vmatmul.mubr.f32.gmra.mrb[0].mxu0 %v539
      %v1314 = vpop.f32.mrb[0].mxu0
      %v1315 = vadd.f32 0.0, %v1314
      %v1316 = vpop.f32.mrb[0].mxu0
      %1317 = vdwg.mxu0
      %v1318 = vmax.f32 %v1219, %v1300
      %v1319 = vmax.f32 %v1220, %v1305
      %v1320 = vmax.f32 %v1221, %v1310
      %v1321 = vmax.f32 %v1222, %v1315
      %v1322 = vsel %vm1227, inf, %v1223
      %v1323 = vsel %vm522, %v1322, inf
      %1324 = vmin.xlane.f32.xlu0 %v1323
      %v1325 = vpop.xlane.xlu0 %1324
      %vm1326 = vcmp.eq.f32.partialorder %v1322, %v1325
      %v1327 = vsel %vm1326, 1, 0
      %v1328 = vcvt.s32.f32 %v1327
      %v1330 = vsel %vm522, %v1328, 0
      %1332 = vmatprep.subr.mxu0 0.0
      %1333 = vmatpush1.xpose.msra.mxu0 %v1330
      %1334 = vmatprep.subr.mxu0 0.0
      %1335 = vmatpush1.xpose.msra.mxu0 0.0
      %1336 = vmatprep.subr.mxu0 0.0
      %1337 = vmatpush1.xpose.msra.mxu0 0.0
      %1338 = vmatprep.subr.mxu0 0.0
      %1339 = vmatpush1.xpose.msra.mxu0 0.0
      %1340 = vmatprep.subr.mxu0 0.0
      %1341 = vmatpush1.xpose.msra.mxu0 0.0
      %1342 = vmatprep.subr.mxu0 0.0
      %1343 = vmatpush1.xpose.msra.mxu0 0.0
      %1344 = vmatprep.subr.mxu0 0.0
      %1345 = vmatpush1.xpose.msra.mxu0 0.0
      %1346 = vmatprep.subr.mxu0 0.0
      %1347 = vmatpush1.xpose.msra.mxu0 0.0
      %1348 = vmatprep.subr.mxu0 0.0
      %1349 = vmatpush1.xpose.msra.mxu0 0.0
      %1350 = vmatprep.subr.mxu0 0.0
      %1351 = vmatpush1.xpose.msra.mxu0 0.0
      %1352 = vmatprep.subr.mxu0 0.0
      %1353 = vmatpush1.xpose.msra.mxu0 0.0
      %1354 = vmatprep.subr.mxu0 0.0
      %1355 = vmatpush1.xpose.msra.mxu0 0.0
      %1356 = vmatprep.subr.mxu0 0.0
      %1357 = vmatpush1.xpose.msra.mxu0 0.0
      %1358 = vmatprep.subr.mxu0 0.0
      %1359 = vmatpush1.xpose.msra.mxu0 0.0
      %1360 = vmatprep.subr.mxu0 0.0
      %1361 = vmatpush1.xpose.msra.mxu0 0.0
      %1362 = vmatprep.subr.mxu0 0.0
      %1363 = vmatpush1.xpose.msra.mxu0 0.0
      %1364 = vmatprep.subr.mxu0 0.0
      %1365 = vmatpush1.xpose.msra.mxu0 0.0
      %1366 = vmatprep.subr.mxu0 0.0
      %1367 = vmatpush1.xpose.msra.mxu0 0.0
      %1368 = vmatprep.subr.mxu0 0.0
      %1369 = vmatpush1.xpose.msra.mxu0 0.0
      %1370 = vmatprep.subr.mxu0 0.0
      %1371 = vmatpush1.xpose.msra.mxu0 0.0
      %1372 = vmatprep.subr.mxu0 0.0
      %1373 = vmatpush1.xpose.msra.mxu0 0.0
      %1374 = vmatprep.subr.mxu0 0.0
      %1375 = vmatpush1.xpose.msra.mxu0 0.0
      %1376 = vmatprep.subr.mxu0 0.0
      %1377 = vmatpush1.xpose.msra.mxu0 0.0
      %1378 = vmatprep.subr.mxu0 0.0
      %1379 = vmatpush1.xpose.msra.mxu0 0.0
      %1380 = vmatprep.subr.mxu0 0.0
      %1381 = vmatpush1.xpose.msra.mxu0 0.0
      %1382 = vmatprep.subr.mxu0 0.0
      %1383 = vmatpush1.xpose.msra.mxu0 0.0
      %1384 = vmatprep.subr.mxu0 0.0
      %1385 = vmatpush1.xpose.msra.mxu0 0.0
      %1386 = vmatprep.subr.mxu0 0.0
      %1387 = vmatpush1.xpose.msra.mxu0 0.0
      %1388 = vmatprep.subr.mxu0 0.0
      %1389 = vmatpush1.xpose.msra.mxu0 0.0
      %1390 = vmatprep.subr.mxu0 0.0
      %1391 = vmatpush1.xpose.msra.mxu0 0.0
      %1392 = vmatprep.subr.mxu0 0.0
      %1393 = vmatpush1.xpose.msra.mxu0 0.0
      %1394 = vmatprep.subr.mxu0 0.0
      %1395 = vmatpush1.xpose.msra.mxu0 0.0
      %1396 = vmatprep.mubr.f32.mxu0 0.0
      %1397 = vmatmul.mubr.f32.gmra.mrb[0].mxu0 %v530
      %v1398 = vpop.f32.mrb[0].mxu0
      %v1399 = vadd.f32 0.0, %v1398
      %v1400 = vpop.f32.mrb[0].mxu0
      %1401 = vmatprep.mubr.f32.mxu0 0.0
      %1402 = vmatmul.mubr.f32.gmra.mrb[0].mxu0 %v533
      %v1403 = vpop.f32.mrb[0].mxu0
      %v1404 = vadd.f32 0.0, %v1403
      %v1405 = vpop.f32.mrb[0].mxu0
      %1406 = vmatprep.mubr.f32.mxu0 0.0
      %1407 = vmatmul.mubr.f32.gmra.mrb[0].mxu0 %v536
      %v1408 = vpop.f32.mrb[0].mxu0
      %v1409 = vadd.f32 0.0, %v1408
      %v1410 = vpop.f32.mrb[0].mxu0
      %1411 = vmatprep.mubr.f32.mxu0 0.0
      %1412 = vmatmul.mubr.f32.gmra.mrb[0].mxu0 %v539
      %v1413 = vpop.f32.mrb[0].mxu0
      %v1414 = vadd.f32 0.0, %v1413
      %v1415 = vpop.f32.mrb[0].mxu0
      %1416 = vdwg.mxu0
      %v1417 = vmax.f32 %v1318, %v1399
      %v1418 = vmax.f32 %v1319, %v1404
      %v1419 = vmax.f32 %v1320, %v1409
      %v1420 = vmax.f32 %v1321, %v1414
      %v1421 = vsel %vm1326, inf, %v1322
      %v1422 = vsel %vm522, %v1421, inf
      %1423 = vmin.xlane.f32.xlu0 %v1422
      %v1424 = vpop.xlane.xlu0 %1423
      %vm1425 = vcmp.eq.f32.partialorder %v1421, %v1424
      %v1426 = vsel %vm1425, 1, 0
      %v1427 = vcvt.s32.f32 %v1426
      %v1429 = vsel %vm522, %v1427, 0
      %1431 = vmatprep.subr.mxu0 0.0
      %1432 = vmatpush1.xpose.msra.mxu0 %v1429
      %1433 = vmatprep.subr.mxu0 0.0
      %1434 = vmatpush1.xpose.msra.mxu0 0.0
      %1435 = vmatprep.subr.mxu0 0.0
      %1436 = vmatpush1.xpose.msra.mxu0 0.0
      %1437 = vmatprep.subr.mxu0 0.0
      %1438 = vmatpush1.xpose.msra.mxu0 0.0
      %1439 = vmatprep.subr.mxu0 0.0
      %1440 = vmatpush1.xpose.msra.mxu0 0.0
      %1441 = vmatprep.subr.mxu0 0.0
      %1442 = vmatpush1.xpose.msra.mxu0 0.0
      %1443 = vmatprep.subr.mxu0 0.0
      %1444 = vmatpush1.xpose.msra.mxu0 0.0
      %1445 = vmatprep.subr.mxu0 0.0
      %1446 = vmatpush1.xpose.msra.mxu0 0.0
      %1447 = vmatprep.subr.mxu0 0.0
      %1448 = vmatpush1.xpose.msra.mxu0 0.0
      %1449 = vmatprep.subr.mxu0 0.0
      %1450 = vmatpush1.xpose.msra.mxu0 0.0
      %1451 = vmatprep.subr.mxu0 0.0
      %1452 = vmatpush1.xpose.msra.mxu0 0.0
      %1453 = vmatprep.subr.mxu0 0.0
      %1454 = vmatpush1.xpose.msra.mxu0 0.0
      %1455 = vmatprep.subr.mxu0 0.0
      %1456 = vmatpush1.xpose.msra.mxu0 0.0
      %1457 = vmatprep.subr.mxu0 0.0
      %1458 = vmatpush1.xpose.msra.mxu0 0.0
      %1459 = vmatprep.subr.mxu0 0.0
      %1460 = vmatpush1.xpose.msra.mxu0 0.0
      %1461 = vmatprep.subr.mxu0 0.0
      %1462 = vmatpush1.xpose.msra.mxu0 0.0
      %1463 = vmatprep.subr.mxu0 0.0
      %1464 = vmatpush1.xpose.msra.mxu0 0.0
      %1465 = vmatprep.subr.mxu0 0.0
      %1466 = vmatpush1.xpose.msra.mxu0 0.0
      %1467 = vmatprep.subr.mxu0 0.0
      %1468 = vmatpush1.xpose.msra.mxu0 0.0
      %1469 = vmatprep.subr.mxu0 0.0
      %1470 = vmatpush1.xpose.msra.mxu0 0.0
      %1471 = vmatprep.subr.mxu0 0.0
      %1472 = vmatpush1.xpose.msra.mxu0 0.0
      %1473 = vmatprep.subr.mxu0 0.0
      %1474 = vmatpush1.xpose.msra.mxu0 0.0
      %1475 = vmatprep.subr.mxu0 0.0
      %1476 = vmatpush1.xpose.msra.mxu0 0.0
      %1477 = vmatprep.subr.mxu0 0.0
      %1478 = vmatpush1.xpose.msra.mxu0 0.0
      %1479 = vmatprep.subr.mxu0 0.0
      %1480 = vmatpush1.xpose.msra.mxu0 0.0
      %1481 = vmatprep.subr.mxu0 0.0
      %1482 = vmatpush1.xpose.msra.mxu0 0.0
      %1483 = vmatprep.subr.mxu0 0.0
      %1484 = vmatpush1.xpose.msra.mxu0 0.0
      %1485 = vmatprep.subr.mxu0 0.0
      %1486 = vmatpush1.xpose.msra.mxu0 0.0
      %1487 = vmatprep.subr.mxu0 0.0
      %1488 = vmatpush1.xpose.msra.mxu0 0.0
      %1489 = vmatprep.subr.mxu0 0.0
      %1490 = vmatpush1.xpose.msra.mxu0 0.0
      %1491 = vmatprep.subr.mxu0 0.0
      %1492 = vmatpush1.xpose.msra.mxu0 0.0
      %1493 = vmatprep.subr.mxu0 0.0
      %1494 = vmatpush1.xpose.msra.mxu0 0.0
      %1495 = vmatprep.mubr.f32.mxu0 0.0
      %1496 = vmatmul.mubr.f32.gmra.mrb[0].mxu0 %v530
      %v1497 = vpop.f32.mrb[0].mxu0
      %v1498 = vadd.f32 0.0, %v1497
      %v1499 = vpop.f32.mrb[0].mxu0
      %1500 = vmatprep.mubr.f32.mxu0 0.0
      %1501 = vmatmul.mubr.f32.gmra.mrb[0].mxu0 %v533
      %v1502 = vpop.f32.mrb[0].mxu0
      %v1503 = vadd.f32 0.0, %v1502
      %v1504 = vpop.f32.mrb[0].mxu0
      %1505 = vmatprep.mubr.f32.mxu0 0.0
      %1506 = vmatmul.mubr.f32.gmra.mrb[0].mxu0 %v536
      %v1507 = vpop.f32.mrb[0].mxu0
      %v1508 = vadd.f32 0.0, %v1507
      %v1509 = vpop.f32.mrb[0].mxu0
      %1510 = vmatprep.mubr.f32.mxu0 0.0
      %1511 = vmatmul.mubr.f32.gmra.mrb[0].mxu0 %v539
      %v1512 = vpop.f32.mrb[0].mxu0
      %v1513 = vadd.f32 0.0, %v1512
      %v1514 = vpop.f32.mrb[0].mxu0
      %1515 = vdwg.mxu0
      %v1516 = vmax.f32 %v1417, %v1498
      %v1517 = vmax.f32 %v1418, %v1503
      %v1518 = vmax.f32 %v1419, %v1508
      %v1519 = vmax.f32 %v1420, %v1513
      %v1520 = vsel %vm1425, inf, %v1421
      %v1521 = vsel %vm522, %v1520, inf
      %1522 = vmin.xlane.f32.xlu0 %v1521
      %v1523 = vpop.xlane.xlu0 %1522
      %vm1524 = vcmp.eq.f32.partialorder %v1520, %v1523
      %v1525 = vsel %vm1524, 1, 0
      %v1526 = vcvt.s32.f32 %v1525
      %v1528 = vsel %vm522, %v1526, 0
      %1530 = vmatprep.subr.mxu0 0.0
      %1531 = vmatpush1.xpose.msra.mxu0 %v1528
      %1532 = vmatprep.subr.mxu0 0.0
      %1533 = vmatpush1.xpose.msra.mxu0 0.0
      %1534 = vmatprep.subr.mxu0 0.0
      %1535 = vmatpush1.xpose.msra.mxu0 0.0
      %1536 = vmatprep.subr.mxu0 0.0
      %1537 = vmatpush1.xpose.msra.mxu0 0.0
      %1538 = vmatprep.subr.mxu0 0.0
      %1539 = vmatpush1.xpose.msra.mxu0 0.0
      %1540 = vmatprep.subr.mxu0 0.0
      %1541 = vmatpush1.xpose.msra.mxu0 0.0
      %1542 = vmatprep.subr.mxu0 0.0
      %1543 = vmatpush1.xpose.msra.mxu0 0.0
      %1544 = vmatprep.subr.mxu0 0.0
      %1545 = vmatpush1.xpose.msra.mxu0 0.0
      %1546 = vmatprep.subr.mxu0 0.0
      %1547 = vmatpush1.xpose.msra.mxu0 0.0
      %1548 = vmatprep.subr.mxu0 0.0
      %1549 = vmatpush1.xpose.msra.mxu0 0.0
      %1550 = vmatprep.subr.mxu0 0.0
      %1551 = vmatpush1.xpose.msra.mxu0 0.0
      %1552 = vmatprep.subr.mxu0 0.0
      %1553 = vmatpush1.xpose.msra.mxu0 0.0
      %1554 = vmatprep.subr.mxu0 0.0
      %1555 = vmatpush1.xpose.msra.mxu0 0.0
      %1556 = vmatprep.subr.mxu0 0.0
      %1557 = vmatpush1.xpose.msra.mxu0 0.0
      %1558 = vmatprep.subr.mxu0 0.0
      %1559 = vmatpush1.xpose.msra.mxu0 0.0
      %1560 = vmatprep.subr.mxu0 0.0
      %1561 = vmatpush1.xpose.msra.mxu0 0.0
      %1562 = vmatprep.subr.mxu0 0.0
      %1563 = vmatpush1.xpose.msra.mxu0 0.0
      %1564 = vmatprep.subr.mxu0 0.0
      %1565 = vmatpush1.xpose.msra.mxu0 0.0
      %1566 = vmatprep.subr.mxu0 0.0
      %1567 = vmatpush1.xpose.msra.mxu0 0.0
      %1568 = vmatprep.subr.mxu0 0.0
      %1569 = vmatpush1.xpose.msra.mxu0 0.0
      %1570 = vmatprep.subr.mxu0 0.0
      %1571 = vmatpush1.xpose.msra.mxu0 0.0
      %1572 = vmatprep.subr.mxu0 0.0
      %1573 = vmatpush1.xpose.msra.mxu0 0.0
      %1574 = vmatprep.subr.mxu0 0.0
      %1575 = vmatpush1.xpose.msra.mxu0 0.0
      %1576 = vmatprep.subr.mxu0 0.0
      %1577 = vmatpush1.xpose.msra.mxu0 0.0
      %1578 = vmatprep.subr.mxu0 0.0
      %1579 = vmatpush1.xpose.msra.mxu0 0.0
      %1580 = vmatprep.subr.mxu0 0.0
      %1581 = vmatpush1.xpose.msra.mxu0 0.0
      %1582 = vmatprep.subr.mxu0 0.0
      %1583 = vmatpush1.xpose.msra.mxu0 0.0
      %1584 = vmatprep.subr.mxu0 0.0
      %1585 = vmatpush1.xpose.msra.mxu0 0.0
      %1586 = vmatprep.subr.mxu0 0.0
      %1587 = vmatpush1.xpose.msra.mxu0 0.0
      %1588 = vmatprep.subr.mxu0 0.0
      %1589 = vmatpush1.xpose.msra.mxu0 0.0
      %1590 = vmatprep.subr.mxu0 0.0
      %1591 = vmatpush1.xpose.msra.mxu0 0.0
      %1592 = vmatprep.subr.mxu0 0.0
      %1593 = vmatpush1.xpose.msra.mxu0 0.0
      %1594 = vmatprep.mubr.f32.mxu0 0.0
      %1595 = vmatmul.mubr.f32.gmra.mrb[0].mxu0 %v530
      %v1596 = vpop.f32.mrb[0].mxu0
      %v1597 = vadd.f32 0.0, %v1596
      %v1598 = vpop.f32.mrb[0].mxu0
      %1599 = vmatprep.mubr.f32.mxu0 0.0
      %1600 = vmatmul.mubr.f32.gmra.mrb[0].mxu0 %v533
      %v1601 = vpop.f32.mrb[0].mxu0
      %v1602 = vadd.f32 0.0, %v1601
      %v1603 = vpop.f32.mrb[0].mxu0
      %1604 = vmatprep.mubr.f32.mxu0 0.0
      %1605 = vmatmul.mubr.f32.gmra.mrb[0].mxu0 %v536
      %v1606 = vpop.f32.mrb[0].mxu0
      %v1607 = vadd.f32 0.0, %v1606
      %v1608 = vpop.f32.mrb[0].mxu0
      %1609 = vmatprep.mubr.f32.mxu0 0.0
      %1610 = vmatmul.mubr.f32.gmra.mrb[0].mxu0 %v539
      %v1611 = vpop.f32.mrb[0].mxu0
      %v1612 = vadd.f32 0.0, %v1611
      %v1613 = vpop.f32.mrb[0].mxu0
      %1614 = vdwg.mxu0
      %v1615 = vmax.f32 %v1516, %v1597
      %v1616 = vmax.f32 %v1517, %v1602
      %v1617 = vmax.f32 %v1518, %v1607
      %v1618 = vmax.f32 %v1519, %v1612
      %v1619 = vsel %vm1524, inf, %v1520
      %v1620 = vsel %vm522, %v1619, inf
      %1621 = vmin.xlane.f32.xlu0 %v1620
      %v1622 = vpop.xlane.xlu0 %1621
      %vm1623 = vcmp.eq.f32.partialorder %v1619, %v1622
      %v1624 = vsel %vm1623, 1, 0
      %v1625 = vcvt.s32.f32 %v1624
      %v1627 = vsel %vm522, %v1625, 0
      %1629 = vmatprep.subr.mxu0 0.0
      %1630 = vmatpush1.xpose.msra.mxu0 %v1627
      %1631 = vmatprep.subr.mxu0 0.0
      %1632 = vmatpush1.xpose.msra.mxu0 0.0
      %1633 = vmatprep.subr.mxu0 0.0
      %1634 = vmatpush1.xpose.msra.mxu0 0.0
      %1635 = vmatprep.subr.mxu0 0.0
      %1636 = vmatpush1.xpose.msra.mxu0 0.0
      %1637 = vmatprep.subr.mxu0 0.0
      %1638 = vmatpush1.xpose.msra.mxu0 0.0
      %1639 = vmatprep.subr.mxu0 0.0
      %1640 = vmatpush1.xpose.msra.mxu0 0.0
      %1641 = vmatprep.subr.mxu0 0.0
      %1642 = vmatpush1.xpose.msra.mxu0 0.0
      %1643 = vmatprep.subr.mxu0 0.0
      %1644 = vmatpush1.xpose.msra.mxu0 0.0
      %1645 = vmatprep.subr.mxu0 0.0
      %1646 = vmatpush1.xpose.msra.mxu0 0.0
      %1647 = vmatprep.subr.mxu0 0.0
      %1648 = vmatpush1.xpose.msra.mxu0 0.0
      %1649 = vmatprep.subr.mxu0 0.0
      %1650 = vmatpush1.xpose.msra.mxu0 0.0
      %1651 = vmatprep.subr.mxu0 0.0
      %1652 = vmatpush1.xpose.msra.mxu0 0.0
      %1653 = vmatprep.subr.mxu0 0.0
      %1654 = vmatpush1.xpose.msra.mxu0 0.0
      %1655 = vmatprep.subr.mxu0 0.0
      %1656 = vmatpush1.xpose.msra.mxu0 0.0
      %1657 = vmatprep.subr.mxu0 0.0
      %1658 = vmatpush1.xpose.msra.mxu0 0.0
      %1659 = vmatprep.subr.mxu0 0.0
      %1660 = vmatpush1.xpose.msra.mxu0 0.0
      %1661 = vmatprep.subr.mxu0 0.0
      %1662 = vmatpush1.xpose.msra.mxu0 0.0
      %1663 = vmatprep.subr.mxu0 0.0
      %1664 = vmatpush1.xpose.msra.mxu0 0.0
      %1665 = vmatprep.subr.mxu0 0.0
      %1666 = vmatpush1.xpose.msra.mxu0 0.0
      %1667 = vmatprep.subr.mxu0 0.0
      %1668 = vmatpush1.xpose.msra.mxu0 0.0
      %1669 = vmatprep.subr.mxu0 0.0
      %1670 = vmatpush1.xpose.msra.mxu0 0.0
      %1671 = vmatprep.subr.mxu0 0.0
      %1672 = vmatpush1.xpose.msra.mxu0 0.0
      %1673 = vmatprep.subr.mxu0 0.0
      %1674 = vmatpush1.xpose.msra.mxu0 0.0
      %1675 = vmatprep.subr.mxu0 0.0
      %1676 = vmatpush1.xpose.msra.mxu0 0.0
      %1677 = vmatprep.subr.mxu0 0.0
      %1678 = vmatpush1.xpose.msra.mxu0 0.0
      %1679 = vmatprep.subr.mxu0 0.0
      %1680 = vmatpush1.xpose.msra.mxu0 0.0
      %1681 = vmatprep.subr.mxu0 0.0
      %1682 = vmatpush1.xpose.msra.mxu0 0.0
      %1683 = vmatprep.subr.mxu0 0.0
      %1684 = vmatpush1.xpose.msra.mxu0 0.0
      %1685 = vmatprep.subr.mxu0 0.0
      %1686 = vmatpush1.xpose.msra.mxu0 0.0
      %1687 = vmatprep.subr.mxu0 0.0
      %1688 = vmatpush1.xpose.msra.mxu0 0.0
      %1689 = vmatprep.subr.mxu0 0.0
      %1690 = vmatpush1.xpose.msra.mxu0 0.0
      %1691 = vmatprep.subr.mxu0 0.0
      %1692 = vmatpush1.xpose.msra.mxu0 0.0
      %1693 = vmatprep.mubr.f32.mxu0 0.0
      %1694 = vmatmul.mubr.f32.gmra.mrb[0].mxu0 %v530
      %v1695 = vpop.f32.mrb[0].mxu0
      %v1696 = vadd.f32 0.0, %v1695
      %v1697 = vpop.f32.mrb[0].mxu0
      %1698 = vmatprep.mubr.f32.mxu0 0.0
      %1699 = vmatmul.mubr.f32.gmra.mrb[0].mxu0 %v533
      %v1700 = vpop.f32.mrb[0].mxu0
      %v1701 = vadd.f32 0.0, %v1700
      %v1702 = vpop.f32.mrb[0].mxu0
      %1703 = vmatprep.mubr.f32.mxu0 0.0
      %1704 = vmatmul.mubr.f32.gmra.mrb[0].mxu0 %v536
      %v1705 = vpop.f32.mrb[0].mxu0
      %v1706 = vadd.f32 0.0, %v1705
      %v1707 = vpop.f32.mrb[0].mxu0
      %1708 = vmatprep.mubr.f32.mxu0 0.0
      %1709 = vmatmul.mubr.f32.gmra.mrb[0].mxu0 %v539
      %v1710 = vpop.f32.mrb[0].mxu0
      %v1711 = vadd.f32 0.0, %v1710
      %v1712 = vpop.f32.mrb[0].mxu0
      %1713 = vdwg.mxu0
      %v1714 = vmax.f32 %v1615, %v1696
      %v1715 = vmax.f32 %v1616, %v1701
      %v1716 = vmax.f32 %v1617, %v1706
      %v1717 = vmax.f32 %v1618, %v1711
      %v1718 = vsel %vm1623, inf, %v1619
      %v1719 = vsel %vm522, %v1718, inf
      %1720 = vmin.xlane.f32.xlu0 %v1719
      %v1721 = vpop.xlane.xlu0 %1720
      %vm1722 = vcmp.eq.f32.partialorder %v1718, %v1721
      %v1723 = vsel %vm1722, 1, 0
      %v1724 = vcvt.s32.f32 %v1723
      %v1726 = vsel %vm522, %v1724, 0
      %1728 = vmatprep.subr.mxu0 0.0
      %1729 = vmatpush1.xpose.msra.mxu0 %v1726
      %1730 = vmatprep.subr.mxu0 0.0
      %1731 = vmatpush1.xpose.msra.mxu0 0.0
      %1732 = vmatprep.subr.mxu0 0.0
      %1733 = vmatpush1.xpose.msra.mxu0 0.0
      %1734 = vmatprep.subr.mxu0 0.0
      %1735 = vmatpush1.xpose.msra.mxu0 0.0
      %1736 = vmatprep.subr.mxu0 0.0
      %1737 = vmatpush1.xpose.msra.mxu0 0.0
      %1738 = vmatprep.subr.mxu0 0.0
      %1739 = vmatpush1.xpose.msra.mxu0 0.0
      %1740 = vmatprep.subr.mxu0 0.0
      %1741 = vmatpush1.xpose.msra.mxu0 0.0
      %1742 = vmatprep.subr.mxu0 0.0
      %1743 = vmatpush1.xpose.msra.mxu0 0.0
      %1744 = vmatprep.subr.mxu0 0.0
      %1745 = vmatpush1.xpose.msra.mxu0 0.0
      %1746 = vmatprep.subr.mxu0 0.0
      %1747 = vmatpush1.xpose.msra.mxu0 0.0
      %1748 = vmatprep.subr.mxu0 0.0
      %1749 = vmatpush1.xpose.msra.mxu0 0.0
      %1750 = vmatprep.subr.mxu0 0.0
      %1751 = vmatpush1.xpose.msra.mxu0 0.0
      %1752 = vmatprep.subr.mxu0 0.0
      %1753 = vmatpush1.xpose.msra.mxu0 0.0
      %1754 = vmatprep.subr.mxu0 0.0
      %1755 = vmatpush1.xpose.msra.mxu0 0.0
      %1756 = vmatprep.subr.mxu0 0.0
      %1757 = vmatpush1.xpose.msra.mxu0 0.0
      %1758 = vmatprep.subr.mxu0 0.0
      %1759 = vmatpush1.xpose.msra.mxu0 0.0
      %1760 = vmatprep.subr.mxu0 0.0
      %1761 = vmatpush1.xpose.msra.mxu0 0.0
      %1762 = vmatprep.subr.mxu0 0.0
      %1763 = vmatpush1.xpose.msra.mxu0 0.0
      %1764 = vmatprep.subr.mxu0 0.0
      %1765 = vmatpush1.xpose.msra.mxu0 0.0
      %1766 = vmatprep.subr.mxu0 0.0
      %1767 = vmatpush1.xpose.msra.mxu0 0.0
      %1768 = vmatprep.subr.mxu0 0.0
      %1769 = vmatpush1.xpose.msra.mxu0 0.0
      %1770 = vmatprep.subr.mxu0 0.0
      %1771 = vmatpush1.xpose.msra.mxu0 0.0
      %1772 = vmatprep.subr.mxu0 0.0
      %1773 = vmatpush1.xpose.msra.mxu0 0.0
      %1774 = vmatprep.subr.mxu0 0.0
      %1775 = vmatpush1.xpose.msra.mxu0 0.0
      %1776 = vmatprep.subr.mxu0 0.0
      %1777 = vmatpush1.xpose.msra.mxu0 0.0
      %1778 = vmatprep.subr.mxu0 0.0
      %1779 = vmatpush1.xpose.msra.mxu0 0.0
      %1780 = vmatprep.subr.mxu0 0.0
      %1781 = vmatpush1.xpose.msra.mxu0 0.0
      %1782 = vmatprep.subr.mxu0 0.0
      %1783 = vmatpush1.xpose.msra.mxu0 0.0
      %1784 = vmatprep.subr.mxu0 0.0
      %1785 = vmatpush1.xpose.msra.mxu0 0.0
      %1786 = vmatprep.subr.mxu0 0.0
      %1787 = vmatpush1.xpose.msra.mxu0 0.0
      %1788 = vmatprep.subr.mxu0 0.0
      %1789 = vmatpush1.xpose.msra.mxu0 0.0
      %1790 = vmatprep.subr.mxu0 0.0
      %1791 = vmatpush1.xpose.msra.mxu0 0.0
      %1792 = vmatprep.mubr.f32.mxu0 0.0
      %1793 = vmatmul.mubr.f32.gmra.mrb[0].mxu0 %v530
      %v1794 = vpop.f32.mrb[0].mxu0
      %v1795 = vadd.f32 0.0, %v1794
      %v1796 = vpop.f32.mrb[0].mxu0
      %1797 = vmatprep.mubr.f32.mxu0 0.0
      %1798 = vmatmul.mubr.f32.gmra.mrb[0].mxu0 %v533
      %v1799 = vpop.f32.mrb[0].mxu0
      %v1800 = vadd.f32 0.0, %v1799
      %v1801 = vpop.f32.mrb[0].mxu0
      %1802 = vmatprep.mubr.f32.mxu0 0.0
      %1803 = vmatmul.mubr.f32.gmra.mrb[0].mxu0 %v536
      %v1804 = vpop.f32.mrb[0].mxu0
      %v1805 = vadd.f32 0.0, %v1804
      %v1806 = vpop.f32.mrb[0].mxu0
      %1807 = vmatprep.mubr.f32.mxu0 0.0
      %1808 = vmatmul.mubr.f32.gmra.mrb[0].mxu0 %v539
      %v1809 = vpop.f32.mrb[0].mxu0
      %v1810 = vadd.f32 0.0, %v1809
      %v1811 = vpop.f32.mrb[0].mxu0
      %1812 = vdwg.mxu0
      %v1813 = vmax.f32 %v1714, %v1795
      %v1814 = vmax.f32 %v1715, %v1800
      %v1815 = vmax.f32 %v1716, %v1805
      %v1816 = vmax.f32 %v1717, %v1810
      %v1817 = vsel %vm1722, inf, %v1718
      %v1818 = vsel %vm522, %v1817, inf
      %1819 = vmin.xlane.f32.xlu0 %v1818
      %v1820 = vpop.xlane.xlu0 %1819
      %vm1821 = vcmp.eq.f32.partialorder %v1817, %v1820
      %v1822 = vsel %vm1821, 1, 0
      %v1823 = vcvt.s32.f32 %v1822
      %v1825 = vsel %vm522, %v1823, 0
      %1827 = vmatprep.subr.mxu0 0.0
      %1828 = vmatpush1.xpose.msra.mxu0 %v1825
      %1829 = vmatprep.subr.mxu0 0.0
      %1830 = vmatpush1.xpose.msra.mxu0 0.0
      %1831 = vmatprep.subr.mxu0 0.0
      %1832 = vmatpush1.xpose.msra.mxu0 0.0
      %1833 = vmatprep.subr.mxu0 0.0
      %1834 = vmatpush1.xpose.msra.mxu0 0.0
      %1835 = vmatprep.subr.mxu0 0.0
      %1836 = vmatpush1.xpose.msra.mxu0 0.0
      %1837 = vmatprep.subr.mxu0 0.0
      %1838 = vmatpush1.xpose.msra.mxu0 0.0
      %1839 = vmatprep.subr.mxu0 0.0
      %1840 = vmatpush1.xpose.msra.mxu0 0.0
      %1841 = vmatprep.subr.mxu0 0.0
      %1842 = vmatpush1.xpose.msra.mxu0 0.0
      %1843 = vmatprep.subr.mxu0 0.0
      %1844 = vmatpush1.xpose.msra.mxu0 0.0
      %1845 = vmatprep.subr.mxu0 0.0
      %1846 = vmatpush1.xpose.msra.mxu0 0.0
      %1847 = vmatprep.subr.mxu0 0.0
      %1848 = vmatpush1.xpose.msra.mxu0 0.0
      %1849 = vmatprep.subr.mxu0 0.0
      %1850 = vmatpush1.xpose.msra.mxu0 0.0
      %1851 = vmatprep.subr.mxu0 0.0
      %1852 = vmatpush1.xpose.msra.mxu0 0.0
      %1853 = vmatprep.subr.mxu0 0.0
      %1854 = vmatpush1.xpose.msra.mxu0 0.0
      %1855 = vmatprep.subr.mxu0 0.0
      %1856 = vmatpush1.xpose.msra.mxu0 0.0
      %1857 = vmatprep.subr.mxu0 0.0
      %1858 = vmatpush1.xpose.msra.mxu0 0.0
      %1859 = vmatprep.subr.mxu0 0.0
      %1860 = vmatpush1.xpose.msra.mxu0 0.0
      %1861 = vmatprep.subr.mxu0 0.0
      %1862 = vmatpush1.xpose.msra.mxu0 0.0
      %1863 = vmatprep.subr.mxu0 0.0
      %1864 = vmatpush1.xpose.msra.mxu0 0.0
      %1865 = vmatprep.subr.mxu0 0.0
      %1866 = vmatpush1.xpose.msra.mxu0 0.0
      %1867 = vmatprep.subr.mxu0 0.0
      %1868 = vmatpush1.xpose.msra.mxu0 0.0
      %1869 = vmatprep.subr.mxu0 0.0
      %1870 = vmatpush1.xpose.msra.mxu0 0.0
      %1871 = vmatprep.subr.mxu0 0.0
      %1872 = vmatpush1.xpose.msra.mxu0 0.0
      %1873 = vmatprep.subr.mxu0 0.0
      %1874 = vmatpush1.xpose.msra.mxu0 0.0
      %1875 = vmatprep.subr.mxu0 0.0
      %1876 = vmatpush1.xpose.msra.mxu0 0.0
      %1877 = vmatprep.subr.mxu0 0.0
      %1878 = vmatpush1.xpose.msra.mxu0 0.0
      %1879 = vmatprep.subr.mxu0 0.0
      %1880 = vmatpush1.xpose.msra.mxu0 0.0
      %1881 = vmatprep.subr.mxu0 0.0
      %1882 = vmatpush1.xpose.msra.mxu0 0.0
      %1883 = vmatprep.subr.mxu0 0.0
      %1884 = vmatpush1.xpose.msra.mxu0 0.0
      %1885 = vmatprep.subr.mxu0 0.0
      %1886 = vmatpush1.xpose.msra.mxu0 0.0
      %1887 = vmatprep.subr.mxu0 0.0
      %1888 = vmatpush1.xpose.msra.mxu0 0.0
      %1889 = vmatprep.subr.mxu0 0.0
      %1890 = vmatpush1.xpose.msra.mxu0 0.0
      %1891 = vmatprep.mubr.f32.mxu0 0.0
      %1892 = vmatmul.mubr.f32.gmra.mrb[0].mxu0 %v530
      %v1893 = vpop.f32.mrb[0].mxu0
      %v1894 = vadd.f32 0.0, %v1893
      %v1895 = vpop.f32.mrb[0].mxu0
      %1896 = vmatprep.mubr.f32.mxu0 0.0
      %1897 = vmatmul.mubr.f32.gmra.mrb[0].mxu0 %v533
      %v1898 = vpop.f32.mrb[0].mxu0
      %v1899 = vadd.f32 0.0, %v1898
      %v1900 = vpop.f32.mrb[0].mxu0
      %1901 = vmatprep.mubr.f32.mxu0 0.0
      %1902 = vmatmul.mubr.f32.gmra.mrb[0].mxu0 %v536
      %v1903 = vpop.f32.mrb[0].mxu0
      %v1904 = vadd.f32 0.0, %v1903
      %v1905 = vpop.f32.mrb[0].mxu0
      %1906 = vmatprep.mubr.f32.mxu0 0.0
      %1907 = vmatmul.mubr.f32.gmra.mrb[0].mxu0 %v539
      %v1908 = vpop.f32.mrb[0].mxu0
      %v1909 = vadd.f32 0.0, %v1908
      %v1910 = vpop.f32.mrb[0].mxu0
      %1911 = vdwg.mxu0
      %v1912 = vmax.f32 %v1813, %v1894
      %v1913 = vmax.f32 %v1814, %v1899
      %v1914 = vmax.f32 %v1815, %v1904
      %v1915 = vmax.f32 %v1816, %v1909
      %v1916 = vsel %vm1821, inf, %v1817
      %v1917 = vsel %vm522, %v1916, inf
      %1918 = vmin.xlane.f32.xlu0 %v1917
      %v1919 = vpop.xlane.xlu0 %1918
      %vm1920 = vcmp.eq.f32.partialorder %v1916, %v1919
      %v1921 = vsel %vm1920, 1, 0
      %v1922 = vcvt.s32.f32 %v1921
      %v1924 = vsel %vm522, %v1922, 0
      %1926 = vmatprep.subr.mxu0 0.0
      %1927 = vmatpush1.xpose.msra.mxu0 %v1924
      %1928 = vmatprep.subr.mxu0 0.0
      %1929 = vmatpush1.xpose.msra.mxu0 0.0
      %1930 = vmatprep.subr.mxu0 0.0
      %1931 = vmatpush1.xpose.msra.mxu0 0.0
      %1932 = vmatprep.subr.mxu0 0.0
      %1933 = vmatpush1.xpose.msra.mxu0 0.0
      %1934 = vmatprep.subr.mxu0 0.0
      %1935 = vmatpush1.xpose.msra.mxu0 0.0
      %1936 = vmatprep.subr.mxu0 0.0
      %1937 = vmatpush1.xpose.msra.mxu0 0.0
      %1938 = vmatprep.subr.mxu0 0.0
      %1939 = vmatpush1.xpose.msra.mxu0 0.0
      %1940 = vmatprep.subr.mxu0 0.0
      %1941 = vmatpush1.xpose.msra.mxu0 0.0
      %1942 = vmatprep.subr.mxu0 0.0
      %1943 = vmatpush1.xpose.msra.mxu0 0.0
      %1944 = vmatprep.subr.mxu0 0.0
      %1945 = vmatpush1.xpose.msra.mxu0 0.0
      %1946 = vmatprep.subr.mxu0 0.0
      %1947 = vmatpush1.xpose.msra.mxu0 0.0
      %1948 = vmatprep.subr.mxu0 0.0
      %1949 = vmatpush1.xpose.msra.mxu0 0.0
      %1950 = vmatprep.subr.mxu0 0.0
      %1951 = vmatpush1.xpose.msra.mxu0 0.0
      %1952 = vmatprep.subr.mxu0 0.0
      %1953 = vmatpush1.xpose.msra.mxu0 0.0
      %1954 = vmatprep.subr.mxu0 0.0
      %1955 = vmatpush1.xpose.msra.mxu0 0.0
      %1956 = vmatprep.subr.mxu0 0.0
      %1957 = vmatpush1.xpose.msra.mxu0 0.0
      %1958 = vmatprep.subr.mxu0 0.0
      %1959 = vmatpush1.xpose.msra.mxu0 0.0
      %1960 = vmatprep.subr.mxu0 0.0
      %1961 = vmatpush1.xpose.msra.mxu0 0.0
      %1962 = vmatprep.subr.mxu0 0.0
      %1963 = vmatpush1.xpose.msra.mxu0 0.0
      %1964 = vmatprep.subr.mxu0 0.0
      %1965 = vmatpush1.xpose.msra.mxu0 0.0
      %1966 = vmatprep.subr.mxu0 0.0
      %1967 = vmatpush1.xpose.msra.mxu0 0.0
      %1968 = vmatprep.subr.mxu0 0.0
      %1969 = vmatpush1.xpose.msra.mxu0 0.0
      %1970 = vmatprep.subr.mxu0 0.0
      %1971 = vmatpush1.xpose.msra.mxu0 0.0
      %1972 = vmatprep.subr.mxu0 0.0
      %1973 = vmatpush1.xpose.msra.mxu0 0.0
      %1974 = vmatprep.subr.mxu0 0.0
      %1975 = vmatpush1.xpose.msra.mxu0 0.0
      %1976 = vmatprep.subr.mxu0 0.0
      %1977 = vmatpush1.xpose.msra.mxu0 0.0
      %1978 = vmatprep.subr.mxu0 0.0
      %1979 = vmatpush1.xpose.msra.mxu0 0.0
      %1980 = vmatprep.subr.mxu0 0.0
      %1981 = vmatpush1.xpose.msra.mxu0 0.0
      %1982 = vmatprep.subr.mxu0 0.0
      %1983 = vmatpush1.xpose.msra.mxu0 0.0
      %1984 = vmatprep.subr.mxu0 0.0
      %1985 = vmatpush1.xpose.msra.mxu0 0.0
      %1986 = vmatprep.subr.mxu0 0.0
      %1987 = vmatpush1.xpose.msra.mxu0 0.0
      %1988 = vmatprep.subr.mxu0 0.0
      %1989 = vmatpush1.xpose.msra.mxu0 0.0
      %1990 = vmatprep.mubr.f32.mxu0 0.0
      %1991 = vmatmul.mubr.f32.gmra.mrb[0].mxu0 %v530
      %v1992 = vpop.f32.mrb[0].mxu0
      %v1993 = vadd.f32 0.0, %v1992
      %v1994 = vpop.f32.mrb[0].mxu0
      %1995 = vmatprep.mubr.f32.mxu0 0.0
      %1996 = vmatmul.mubr.f32.gmra.mrb[0].mxu0 %v533
      %v1997 = vpop.f32.mrb[0].mxu0
      %v1998 = vadd.f32 0.0, %v1997
      %v1999 = vpop.f32.mrb[0].mxu0
      %2000 = vmatprep.mubr.f32.mxu0 0.0
      %2001 = vmatmul.mubr.f32.gmra.mrb[0].mxu0 %v536
      %v2002 = vpop.f32.mrb[0].mxu0
      %v2003 = vadd.f32 0.0, %v2002
      %v2004 = vpop.f32.mrb[0].mxu0
      %2005 = vmatprep.mubr.f32.mxu0 0.0
      %2006 = vmatmul.mubr.f32.gmra.mrb[0].mxu0 %v539
      %v2007 = vpop.f32.mrb[0].mxu0
      %v2008 = vadd.f32 0.0, %v2007
      %v2009 = vpop.f32.mrb[0].mxu0
      %2010 = vdwg.mxu0
      %v2011 = vmax.f32 %v1912, %v1993
      %v2012 = vmax.f32 %v1913, %v1998
      %v2013 = vmax.f32 %v1914, %v2003
      %v2014 = vmax.f32 %v1915, %v2008
      %v2015 = vsel %vm1920, inf, %v1916
      %v2016 = vsel %vm522, %v2015, inf
      %2017 = vmin.xlane.f32.xlu0 %v2016
      %v2018 = vpop.xlane.xlu0 %2017
      %vm2019 = vcmp.eq.f32.partialorder %v2015, %v2018
      %v2020 = vsel %vm2019, 1, 0
      %v2021 = vcvt.s32.f32 %v2020
      %v2023 = vsel %vm522, %v2021, 0
      %2025 = vmatprep.subr.mxu0 0.0
      %2026 = vmatpush1.xpose.msra.mxu0 %v2023
      %2027 = vmatprep.subr.mxu0 0.0
      %2028 = vmatpush1.xpose.msra.mxu0 0.0
      %2029 = vmatprep.subr.mxu0 0.0
      %2030 = vmatpush1.xpose.msra.mxu0 0.0
      %2031 = vmatprep.subr.mxu0 0.0
      %2032 = vmatpush1.xpose.msra.mxu0 0.0
      %2033 = vmatprep.subr.mxu0 0.0
      %2034 = vmatpush1.xpose.msra.mxu0 0.0
      %2035 = vmatprep.subr.mxu0 0.0
      %2036 = vmatpush1.xpose.msra.mxu0 0.0
      %2037 = vmatprep.subr.mxu0 0.0
      %2038 = vmatpush1.xpose.msra.mxu0 0.0
      %2039 = vmatprep.subr.mxu0 0.0
      %2040 = vmatpush1.xpose.msra.mxu0 0.0
      %2041 = vmatprep.subr.mxu0 0.0
      %2042 = vmatpush1.xpose.msra.mxu0 0.0
      %2043 = vmatprep.subr.mxu0 0.0
      %2044 = vmatpush1.xpose.msra.mxu0 0.0
      %2045 = vmatprep.subr.mxu0 0.0
      %2046 = vmatpush1.xpose.msra.mxu0 0.0
      %2047 = vmatprep.subr.mxu0 0.0
      %2048 = vmatpush1.xpose.msra.mxu0 0.0
      %2049 = vmatprep.subr.mxu0 0.0
      %2050 = vmatpush1.xpose.msra.mxu0 0.0
      %2051 = vmatprep.subr.mxu0 0.0
      %2052 = vmatpush1.xpose.msra.mxu0 0.0
      %2053 = vmatprep.subr.mxu0 0.0
      %2054 = vmatpush1.xpose.msra.mxu0 0.0
      %2055 = vmatprep.subr.mxu0 0.0
      %2056 = vmatpush1.xpose.msra.mxu0 0.0
      %2057 = vmatprep.subr.mxu0 0.0
      %2058 = vmatpush1.xpose.msra.mxu0 0.0
      %2059 = vmatprep.subr.mxu0 0.0
      %2060 = vmatpush1.xpose.msra.mxu0 0.0
      %2061 = vmatprep.subr.mxu0 0.0
      %2062 = vmatpush1.xpose.msra.mxu0 0.0
      %2063 = vmatprep.subr.mxu0 0.0
      %2064 = vmatpush1.xpose.msra.mxu0 0.0
      %2065 = vmatprep.subr.mxu0 0.0
      %2066 = vmatpush1.xpose.msra.mxu0 0.0
      %2067 = vmatprep.subr.mxu0 0.0
      %2068 = vmatpush1.xpose.msra.mxu0 0.0
      %2069 = vmatprep.subr.mxu0 0.0
      %2070 = vmatpush1.xpose.msra.mxu0 0.0
      %2071 = vmatprep.subr.mxu0 0.0
      %2072 = vmatpush1.xpose.msra.mxu0 0.0
      %2073 = vmatprep.subr.mxu0 0.0
      %2074 = vmatpush1.xpose.msra.mxu0 0.0
      %2075 = vmatprep.subr.mxu0 0.0
      %2076 = vmatpush1.xpose.msra.mxu0 0.0
      %2077 = vmatprep.subr.mxu0 0.0
      %2078 = vmatpush1.xpose.msra.mxu0 0.0
      %2079 = vmatprep.subr.mxu0 0.0
      %2080 = vmatpush1.xpose.msra.mxu0 0.0
      %2081 = vmatprep.subr.mxu0 0.0
      %2082 = vmatpush1.xpose.msra.mxu0 0.0
      %2083 = vmatprep.subr.mxu0 0.0
      %2084 = vmatpush1.xpose.msra.mxu0 0.0
      %2085 = vmatprep.subr.mxu0 0.0
      %2086 = vmatpush1.xpose.msra.mxu0 0.0
      %2087 = vmatprep.subr.mxu0 0.0
      %2088 = vmatpush1.xpose.msra.mxu0 0.0
      %2089 = vmatprep.mubr.f32.mxu0 0.0
      %2090 = vmatmul.mubr.f32.gmra.mrb[0].mxu0 %v530
      %v2091 = vpop.f32.mrb[0].mxu0
      %v2092 = vadd.f32 0.0, %v2091
      %v2093 = vpop.f32.mrb[0].mxu0
      %2094 = vmatprep.mubr.f32.mxu0 0.0
      %2095 = vmatmul.mubr.f32.gmra.mrb[0].mxu0 %v533
      %v2096 = vpop.f32.mrb[0].mxu0
      %v2097 = vadd.f32 0.0, %v2096
      %v2098 = vpop.f32.mrb[0].mxu0
      %2099 = vmatprep.mubr.f32.mxu0 0.0
      %2100 = vmatmul.mubr.f32.gmra.mrb[0].mxu0 %v536
      %v2101 = vpop.f32.mrb[0].mxu0
      %v2102 = vadd.f32 0.0, %v2101
      %v2103 = vpop.f32.mrb[0].mxu0
      %2104 = vmatprep.mubr.f32.mxu0 0.0
      %2105 = vmatmul.mubr.f32.gmra.mrb[0].mxu0 %v539
      %v2106 = vpop.f32.mrb[0].mxu0
      %v2107 = vadd.f32 0.0, %v2106
      %v2108 = vpop.f32.mrb[0].mxu0
      %2109 = vdwg.mxu0
      %v2110 = vmax.f32 %v2011, %v2092
      %v2111 = vmax.f32 %v2012, %v2097
      %v2112 = vmax.f32 %v2013, %v2102
      %v2113 = vmax.f32 %v2014, %v2107
      %vm2114 = vcmask 64512
      %2115 = vst.msk [vmem:[%s286] sm:$0xff] %vm2114, %v2110
      %2116 = vst.msk [vmem:[%s286 + $0x8] sm:$0xff] %vm2114, %v2111
      %2117 = vst.msk [vmem:[%s286 + $0x10] sm:$0xff] %vm2114, %v2112
      %2118 = vst.msk [vmem:[%s286 + $0x18] sm:$0xff] %vm2114, %v2113
      %p2119 = scmp.lt.s32.totalorder %s20, 1
      %s2120 = scalar_select %p2119, %s20, 1
      %p2121 = scmp.lt.s32.totalorder %s21, 0
      %s2122 = scalar_select %p2121, %s21, 0
      %s2123 = smul.addr %s2120, 4
      %s2124 = sadd.s32 %s2122, %s2123
      %s2125 = smul.addr %s2124, 8
      %s2126 = scalar_lea.vmem %s5, %s2125
      // Predicated region
      $region45: #{tpu_custom_call.1} parent=39 // pred_check
        %p2127 = pneg %p170
      $region46: #{tpu_custom_call.1} parent=39 // pred_check_branch
        %2129 = sbr.rel (%p2127) target = $region48
      $region47: #{tpu_custom_call.1} parent=39 // pred_region
        _
      $region48: #{tpu_custom_call.1} parent=39 // pred_fallthru
        _
    $region40: #{tpu_custom_call.1} parent=5 // pred_fallthru
      _
    %p2130 = scmp.le.s32.totalorder 2, %s11
    // Predicated region
    $region49: #{tpu_custom_call.1} parent=5 // pred_check
      %p2131 = pneg %p2130
    $region50: #{tpu_custom_call.1} parent=5 // pred_check_branch
      %2133 = sbr.rel (%p2131) target = $region52
    $region51: #{tpu_custom_call.1} parent=5 // pred_region
      %s2134 = ssub.s32 %s11, 2
      // Predicated region
      $region53: #{tpu_custom_call.1} parent=51 // pred_check
        %p2135 = pneg %p176
      $region54: #{tpu_custom_call.1} parent=51 // pred_check_branch
        %2137 = sbr.rel (%p2135) target = $region56
      $region55: #{tpu_custom_call.1} parent=51 // pred_region
        %p2138 = scmp.lt.s32.totalorder %s22, 1
        %s2139 = scalar_select %p2138, %s22, 1
        %p2140 = scmp.lt.s32.totalorder %s23, 0
        %s2141 = scalar_select %p2140, %s23, 0
        %s2142 = smul.addr %s2139, 4
        %s2143 = sadd.s32 %s2141, %s2142
        %s2144 = smul.addr %s2143, 8
        %s2145 = scalar_lea.vmem %s5, %s2144
      $region56: #{tpu_custom_call.1} parent=51 // pred_fallthru
        _
    $region52: #{tpu_custom_call.1} parent=5 // pred_fallthru
      _
  $region6: #{tpu_custom_call.1} parent=0 // loop_footer
    %s15 = sadd.s32 1, %s11
  $region7: #{tpu_custom_call.1} parent=0 // loop_footer_branch
    %10 = sbr.rel target = $region3
  $region8: #{tpu_custom_call.1} parent=0 // loop_exit
    _

</llo_original>
